<compile_context>
chip_gen: v7x
topology: tpu7x:2x2x1
jax: 0.10.0
libtpu: 0.0.40
codegen_flags: <defaults>
</compile_context>

<pallas_src>
import jax
import jax.numpy as jnp
from jax.experimental import pallas as pl
from jax.experimental.pallas import tpu as pltpu


# ---------------------------------------------------------------------------
# One-time weight packing (init time, NOT inside the jitted forward).
# ---------------------------------------------------------------------------
def _phase_weight(w):
    """torch ConvTranspose2d weight (Cin, Cout, 3, 3) -> Wt[p, q, co, d, e, ci].

    Wt[p, q, co, d, e, ci] = w[ci, co, p - 2d + 1, q - 2e + 1]   (0 if kernel idx invalid)
    so that  out[2i+p, 2j+q, co] = sum_{d,e,ci} Wt[p,q,co,d,e,ci] * x[i+d, j+e, ci].
    """
    Cin, Cout = w.shape[0], w.shape[1]
    blocks = []
    for p in (0, 1):
        for q in (0, 1):
            for d in (0, 1):
                for e in (0, 1):
                    ky, kx = p - 2 * d + 1, q - 2 * e + 1
                    if 0 <= ky < 3 and 0 <= kx < 3:
                        blocks.append(w[:, :, ky, kx].T)                 # (Cout, Cin)
                    else:
                        blocks.append(jnp.zeros((Cout, Cin), w.dtype))
    wt = jnp.stack(blocks, 0).reshape(2, 2, 2, 2, Cout, Cin)             # (p,q,d,e,co,ci)
    return jnp.transpose(wt, (0, 1, 4, 2, 3, 5))                         # (p,q,co,d,e,ci)


def pack_decoder_weights(w1, b1, w2, b2):
    """Precompute the fused-kernel weights (call once at init).

    Layer-1 rows:  r1 = ((dh*2+dw)*4 + (py1*2+px1)) * C1 + c1
      = layer-1 output value at pixel (2*(h+dh)+py1, 2*(w+dw)+px1), i.e. the 4 spatially
        shifted copies layer 2 needs as taps.
    Layer-2 rows:  r2 = (((a*2+b)*2 + py2)*2 + px2) * C2 + c2
      = final output value at pixel (4h + 2a + py2, 4w + 2b + px2).
    """
    Cin, C1 = w1.shape[0], w1.shape[1]
    C2 = w2.shape[1]
    f32 = jnp.float32

    w1t = _phase_weight(w1.astype(f32))            # (py1, px1, c1, dy, dx, ci)
    w2t = _phase_weight(w2.astype(f32))            # (py2, px2, c2, dy2, dx2, c1)

    d2 = jnp.arange(2)
    d3 = jnp.arange(3)
    # T[dh, s, dy] = 1  iff  s == dh + dy : which of the 9 input taps feeds tap dy of the
    # (dh, dw)-shifted layer-1 evaluation.
    T = (d3[None, :, None] == d2[:, None, None] + d2[None, None, :]).astype(f32)
    # S[a, dh, py1, dy2] = 1 iff a + dy2 == 2*dh + py1 : layer-2 tap dy2 at output base
    # phase a lands on layer-1 row group (dh, py1).
    S = ((d2[:, None, None, None] + d2[None, None, None, :]) ==
         (2 * d2[None, :, None, None] + d2[None, None, :, None])).astype(f32)

    w1a = jnp.einsum('hsd,wte,yxidej->hwyxistj', T, T, w1t).reshape(16 * C1, 9 * Cin)
    w2a = jnp.einsum('ahyd,bwxe,pqodei->abpqohwyxi', S, S, w2t).reshape(16 * C2, 16 * C1)
    b1a = jnp.tile(b1.astype(f32), 16).reshape(16 * C1, 1)
    b2a = jnp.tile(b2.astype(f32), 16).reshape(16 * C2, 1)
    return w1a.astype(jnp.bfloat16), b1a, w2a.astype(jnp.bfloat16), b2a


# ---------------------------------------------------------------------------
# The fused kernel: taps -> conv_t1 + ReLU -> boundary mask -> conv_t2 + sigmoid.
# ---------------------------------------------------------------------------
def _decoder_kernel(x9_ref, w1_ref, b1_ref, w2_ref, b2_ref,
                    rh_ref, rw_ref, ch_ref, cw_ref, o_ref):
    # ---- layer 1 (all 4 shifted evaluations at once), f32 MXU accumulate ----
    h = jnp.dot(w1_ref[...], x9_ref[...], preferred_element_type=jnp.float32)
    h = jnp.maximum(h + b1_ref[...], 0.0)                 # (16*C1, M) f32
    # Zero the columns that fall outside the layer-1 output for the shifted copies
    # (the implicit zero padding layer 2's transposed conv requires):
    #   keep = (h+dh < H) & (w+dw < W) = (1 - [dh==1]*[h==H-1]) * (1 - [dw==1]*[w==W-1])
    keep = (1.0 - rh_ref[...] * ch_ref[...]) * (1.0 - rw_ref[...] * cw_ref[...])
    h = h * keep
    # ---- layer 2 + exact sigmoid (EUP tanh, result provably in [0, 1]) ------
    y = jnp.dot(w2_ref[...], h.astype(jnp.bfloat16),
                preferred_element_type=jnp.float32)
    y = y + b2_ref[...]
    y = 0.5 * jnp.tanh(0.5 * y) + 0.5
    o_ref[...] = y.astype(o_ref.dtype)


# ---------------------------------------------------------------------------
# Forward wrapper (jit this).
# ---------------------------------------------------------------------------
def _input_taps9(x):
    """(N, Cin, H, W) -> (N, 9*Cin, H*W); row (s*3+t)*Cin + ci holds x[:, ci, h+s, w+t]
    (zero beyond the input extent); column index = h*W + w."""
    N, Cin, H, W = x.shape
    xp = jnp.pad(x, ((0, 0), (0, 0), (0, 2), (0, 2)))
    taps = jnp.stack([xp[:, :, s:s + H, t:t + W]
                      for s in range(3) for t in range(3)], axis=1)      # (N,9,Cin,H,W)
    return taps.reshape(N, 9 * Cin, H * W)


def color_decoder_forward(x, w1a, b1a, w2a, b2a):
    """Fused ColorDecoder forward.  x: (N, Cin, H, W) f32 -> (N, C2, 4H, 4W) f32."""
    N, Cin, H, W = x.shape
    C1 = w1a.shape[0] // 16
    C2 = w2a.shape[0] // 16
    M = H * W
    Mp = pl.cdiv(M, 128) * 128                      # lane-dense column count

    x9 = _input_taps9(x).astype(jnp.bfloat16)       # (N, 9*Cin, M) ~74 KB at test shape
    if Mp != M:
        x9 = jnp.pad(x9, ((0, 0), (0, 0), (0, Mp - M)))

    # Factored boundary-mask vectors (outer products are formed in-kernel); rows are
    # tagged by the (dh, dw) shift of the layer-1 evaluation, columns by the (h, w) pixel.
    r = jnp.arange(16 * C1)
    rh = (r >= 8 * C1).astype(jnp.float32).reshape(-1, 1)                 # dh == 1
    rw = ((r % (8 * C1)) >= 4 * C1).astype(jnp.float32).reshape(-1, 1)    # dw == 1
    m = jnp.arange(Mp)
    ch = ((m // W) == H - 1).astype(jnp.float32).reshape(1, -1)           # h == H-1
    cw = ((m % W) == W - 1).astype(jnp.float32).reshape(1, -1)            # w == W-1

    yp = pl.pallas_call(
        _decoder_kernel,
        out_shape=jax.ShapeDtypeStruct((N, 16 * C2, Mp), jnp.float32),
        grid=(N,),
        in_specs=[
            pl.BlockSpec((None, 9 * Cin, Mp), lambda n: (n, 0, 0)),   # streamed tap stack
            pl.BlockSpec((16 * C1, 9 * Cin), lambda n: (0, 0)),       # resident weights
            pl.BlockSpec((16 * C1, 1), lambda n: (0, 0)),
            pl.BlockSpec((16 * C2, 16 * C1), lambda n: (0, 0)),
            pl.BlockSpec((16 * C2, 1), lambda n: (0, 0)),
            pl.BlockSpec((16 * C1, 1), lambda n: (0, 0)),             # mask factors
            pl.BlockSpec((16 * C1, 1), lambda n: (0, 0)),
            pl.BlockSpec((1, Mp), lambda n: (0, 0)),
            pl.BlockSpec((1, Mp), lambda n: (0, 0)),
        ],
        out_specs=pl.BlockSpec((None, 16 * C2, Mp), lambda n: (n, 0, 0)),
        compiler_params=pltpu.CompilerParams(
            dimension_semantics=("parallel",),      # one image per TensorCore on v7x
        ),
    )(x9, w1a, b1a, w2a, b2a, rh, rw, ch, cw)

    if Mp != M:
        yp = yp[:, :, :M]
    # Depth-to-space: rows (a, b, py2, px2, c2) x cols (h, w) -> (N, C2, 4H, 4W).
    # TODO(synk): could be folded into the kernel with a strided writeback.
    y = yp.reshape(N, 2, 2, 2, 2, C2, H, W)
    y = jnp.transpose(y, (0, 5, 6, 1, 3, 7, 2, 4))
    return y.reshape(N, C2, 4 * H, 4 * W)


# ---------------------------------------------------------------------------
# Pure-JAX reference (zero-insertion + flipped-kernel correlation), f32.
# ---------------------------------------------------------------------------
def _conv_transpose_ref(x, weight, bias):
    N, Cin, H, W = x.shape
    Cout = weight.shape[1]
    Ho, Wo = 2 * H, 2 * W
    xd = jnp.zeros((N, Cin, 2 * H - 1, 2 * W - 1), jnp.float32)
    xd = xd.at[:, :, ::2, ::2].set(x.astype(jnp.float32))
    xp = jnp.pad(xd, ((0, 0), (0, 0), (1, 2), (1, 2)))
    wf = jnp.flip(weight.astype(jnp.float32), (2, 3))
    out = jnp.zeros((N, Cout, Ho, Wo), jnp.float32)
    for ky in range(3):
        for kx in range(3):
            out = out + jnp.einsum('nchw,cd->ndhw',
                                   xp[:, :, ky:ky + Ho, kx:kx + Wo],
                                   wf[:, :, ky, kx])
    return out + bias[None, :, None, None]


def _decoder_ref(x, w1, b1, w2, b2):
    h = jnp.maximum(_conv_transpose_ref(x, w1, b1), 0.0)
    y = _conv_transpose_ref(h, w2, b2)
    return 1.0 / (1.0 + jnp.exp(-y))


if __name__ == "__main__":
    key = jax.random.PRNGKey(0)
    k1, k2, k3, k4, k5 = jax.random.split(key, 5)

    # PyTorch ConvTranspose2d weight layout: (in_channels, out_channels, kH, kW).
    w1 = jax.random.normal(k1, (8, 16, 3, 3), jnp.float32) * 0.1
    b1 = jax.random.normal(k2, (16,), jnp.float32) * 0.1
    w2 = jax.random.normal(k3, (16, 3, 3, 3), jnp.float32) * 0.1
    b2 = jax.random.normal(k4, (3,), jnp.float32) * 0.1

    # Input: N=2, C=8, H=W=16 (NCHW, matching the PyTorch module).
    x = jax.random.normal(k5, (2, 8, 16, 16), jnp.float32)

    # One-time packing at init (hoisted out of the jitted forward).
    w1a, b1a, w2a, b2a = pack_decoder_weights(w1, b1, w2, b2)

    fwd = jax.jit(color_decoder_forward)
    y = jax.block_until_ready(fwd(x, w1a, b1a, w2a, b2a))

    assert y.shape == (2, 3, 64, 64), y.shape
    assert bool(jnp.all(jnp.isfinite(y)))
    assert bool(jnp.all(y >= 0.0)) and bool(jnp.all(y <= 1.0))   # sigmoid output

    # Correctness check against the pure-JAX reference (bf16 matmul tolerance).
    y_ref = jax.block_until_ready(jax.jit(_decoder_ref)(x, w1, b1, w2, b2))
    max_err = float(jnp.max(jnp.abs(y - y_ref)))
    assert max_err < 5e-2, max_err

    print("KERNEL_OK")
</pallas_src>

<mosaic_0001>
module attributes {stable_mosaic.version = 11 : i64} {
  func.func @_decoder_kernel(%arg0: i32, %arg1: memref<1x72x256xbf16, #tpu.memory_space<vmem>>, %arg2: memref<256x72xbf16, #tpu.memory_space<vmem>>, %arg3: memref<256x1xf32, #tpu.memory_space<vmem>>, %arg4: memref<48x256xbf16, #tpu.memory_space<vmem>>, %arg5: memref<48x1xf32, #tpu.memory_space<vmem>>, %arg6: memref<256x1xf32, #tpu.memory_space<vmem>>, %arg7: memref<256x1xf32, #tpu.memory_space<vmem>>, %arg8: memref<1x256xf32, #tpu.memory_space<vmem>>, %arg9: memref<1x256xf32, #tpu.memory_space<vmem>>, %arg10: memref<1x48x256xf32, #tpu.memory_space<vmem>>) attributes {dimension_semantics = [#tpu.dimension_semantics<parallel>], iteration_bounds = array<i64: 2>, scalar_prefetch = 0 : i64, scratch_operands = 0 : i64, tpu.core_type = #tpu.core_type<tc>, window_params = [{transform_indices = @transform_0, window_bounds = array<i64: 1, 72, 256>}, {pipeline_mode = #tpu.pipeline_mode<synchronous>, transform_indices = @transform_1, window_bounds = array<i64: 256, 72>}, {pipeline_mode = #tpu.pipeline_mode<synchronous>, transform_indices = @transform_2, window_bounds = array<i64: 256, 1>}, {pipeline_mode = #tpu.pipeline_mode<synchronous>, transform_indices = @transform_3, window_bounds = array<i64: 48, 256>}, {pipeline_mode = #tpu.pipeline_mode<synchronous>, transform_indices = @transform_4, window_bounds = array<i64: 48, 1>}, {pipeline_mode = #tpu.pipeline_mode<synchronous>, transform_indices = @transform_5, window_bounds = array<i64: 256, 1>}, {pipeline_mode = #tpu.pipeline_mode<synchronous>, transform_indices = @transform_6, window_bounds = array<i64: 256, 1>}, {pipeline_mode = #tpu.pipeline_mode<synchronous>, transform_indices = @transform_7, window_bounds = array<i64: 1, 256>}, {pipeline_mode = #tpu.pipeline_mode<synchronous>, transform_indices = @transform_8, window_bounds = array<i64: 1, 256>}, {transform_indices = @transform_9, window_bounds = array<i64: 1, 48, 256>}]} {
    %c0 = arith.constant 0 : index
    %c0_0 = arith.constant 0 : index
    %0 = vector.load %arg2[%c0, %c0_0] : memref<256x72xbf16, #tpu.memory_space<vmem>>, vector<256x72xbf16>
    %c0_1 = arith.constant 0 : index
    %c0_2 = arith.constant 0 : index
    %c0_3 = arith.constant 0 : index
    %1 = vector.load %arg1[%c0_1, %c0_2, %c0_3] : memref<1x72x256xbf16, #tpu.memory_space<vmem>>, vector<1x72x256xbf16>
    %2 = vector.shape_cast %1 : vector<1x72x256xbf16> to vector<72x256xbf16>
    %cst = arith.constant dense<0.000000e+00> : vector<256x256xf32>
    %3 = tpu.matmul %0, %2, %cst {dimension_numbers = #tpu.dot_dimension_numbers<[1], [0], [0], [1], [0, 0, 1, 1], [], []>} : vector<256x72xbf16>, vector<72x256xbf16>, vector<256x256xf32> -> vector<256x256xf32>
    %c0_4 = arith.constant 0 : index
    %c0_5 = arith.constant 0 : index
    %4 = vector.load %arg3[%c0_4, %c0_5] : memref<256x1xf32, #tpu.memory_space<vmem>>, vector<256x1xf32>
    %5 = vector.broadcast %4 : vector<256x1xf32> to vector<256x256xf32>
    %6 = arith.addf %3, %5 : vector<256x256xf32>
    %cst_6 = arith.constant 0.000000e+00 : f32
    %7 = vector.broadcast %cst_6 : f32 to vector<256x256xf32>
    %8 = arith.maximumf %6, %7 : vector<256x256xf32>
    %c0_7 = arith.constant 0 : index
    %c0_8 = arith.constant 0 : index
    %9 = vector.load %arg6[%c0_7, %c0_8] : memref<256x1xf32, #tpu.memory_space<vmem>>, vector<256x1xf32>
    %c0_9 = arith.constant 0 : index
    %c0_10 = arith.constant 0 : index
    %10 = vector.load %arg8[%c0_9, %c0_10] : memref<1x256xf32, #tpu.memory_space<vmem>>, vector<1x256xf32>
    %11 = vector.broadcast %9 : vector<256x1xf32> to vector<256x256xf32>
    %12 = vector.broadcast %10 : vector<1x256xf32> to vector<256x256xf32>
    %13 = arith.mulf %11, %12 : vector<256x256xf32>
    %cst_11 = arith.constant 1.000000e+00 : f32
    %14 = vector.broadcast %cst_11 : f32 to vector<256x256xf32>
    %15 = arith.subf %14, %13 : vector<256x256xf32>
    %c0_12 = arith.constant 0 : index
    %c0_13 = arith.constant 0 : index
    %16 = vector.load %arg7[%c0_12, %c0_13] : memref<256x1xf32, #tpu.memory_space<vmem>>, vector<256x1xf32>
    %c0_14 = arith.constant 0 : index
    %c0_15 = arith.constant 0 : index
    %17 = vector.load %arg9[%c0_14, %c0_15] : memref<1x256xf32, #tpu.memory_space<vmem>>, vector<1x256xf32>
    %18 = vector.broadcast %16 : vector<256x1xf32> to vector<256x256xf32>
    %19 = vector.broadcast %17 : vector<1x256xf32> to vector<256x256xf32>
    %20 = arith.mulf %18, %19 : vector<256x256xf32>
    %cst_16 = arith.constant 1.000000e+00 : f32
    %21 = vector.broadcast %cst_16 : f32 to vector<256x256xf32>
    %22 = arith.subf %21, %20 : vector<256x256xf32>
    %23 = arith.mulf %15, %22 : vector<256x256xf32>
    %24 = arith.mulf %8, %23 : vector<256x256xf32>
    %c0_17 = arith.constant 0 : index
    %c0_18 = arith.constant 0 : index
    %25 = vector.load %arg4[%c0_17, %c0_18] : memref<48x256xbf16, #tpu.memory_space<vmem>>, vector<48x256xbf16>
    %26 = arith.truncf %24 : vector<256x256xf32> to vector<256x256xbf16>
    %cst_19 = arith.constant dense<0.000000e+00> : vector<48x256xf32>
    %27 = tpu.matmul %25, %26, %cst_19 {dimension_numbers = #tpu.dot_dimension_numbers<[1], [0], [0], [1], [0, 0, 1, 1], [], []>} : vector<48x256xbf16>, vector<256x256xbf16>, vector<48x256xf32> -> vector<48x256xf32>
    %c0_20 = arith.constant 0 : index
    %c0_21 = arith.constant 0 : index
    %28 = vector.load %arg5[%c0_20, %c0_21] : memref<48x1xf32, #tpu.memory_space<vmem>>, vector<48x1xf32>
    %29 = vector.broadcast %28 : vector<48x1xf32> to vector<48x256xf32>
    %30 = arith.addf %27, %29 : vector<48x256xf32>
    %cst_22 = arith.constant 5.000000e-01 : f32
    %31 = vector.broadcast %cst_22 : f32 to vector<48x256xf32>
    %32 = arith.mulf %31, %30 : vector<48x256xf32>
    %33 = math.tanh %32 : vector<48x256xf32>
    %cst_23 = arith.constant 5.000000e-01 : f32
    %34 = vector.broadcast %cst_23 : f32 to vector<48x256xf32>
    %35 = arith.mulf %34, %33 : vector<48x256xf32>
    %cst_24 = arith.constant 5.000000e-01 : f32
    %36 = vector.broadcast %cst_24 : f32 to vector<48x256xf32>
    %37 = arith.addf %35, %36 : vector<48x256xf32>
    %c0_25 = arith.constant 0 : index
    %c0_26 = arith.constant 0 : index
    %c0_27 = arith.constant 0 : index
    %38 = vector.load %arg10[%c0_25, %c0_26, %c0_27] : memref<1x48x256xf32, #tpu.memory_space<vmem>>, vector<1x48x256xf32>
    %39 = vector.shape_cast %38 : vector<1x48x256xf32> to vector<48x256xf32>
    %40 = vector.shape_cast %37 : vector<48x256xf32> to vector<1x48x256xf32>
    tpu.vector_store %arg10[%c0_25, %c0_26, %c0_27], %40 {strides = array<i32>} : memref<1x48x256xf32, #tpu.memory_space<vmem>>, vector<1x48x256xf32>,
    return
  }
  func.func @transform_0(%arg0: i32) -> (i32, i32, i32) {
    %c0_i32 = arith.constant 0 : i32
    %c0_i32_0 = arith.constant 0 : i32
    %c0_i32_1 = arith.constant 0 : i32
    return %arg0, %c0_i32, %c0_i32_0 : i32, i32, i32
  }
  func.func @transform_1(%arg0: i32) -> (i32, i32) {
    %c0_i32 = arith.constant 0 : i32
    %c0_i32_0 = arith.constant 0 : i32
    %c0_i32_1 = arith.constant 0 : i32
    return %c0_i32, %c0_i32_0 : i32, i32
  }
  func.func @transform_2(%arg0: i32) -> (i32, i32) {
    %c0_i32 = arith.constant 0 : i32
    %c0_i32_0 = arith.constant 0 : i32
    %c0_i32_1 = arith.constant 0 : i32
    return %c0_i32, %c0_i32_0 : i32, i32
  }
  func.func @transform_3(%arg0: i32) -> (i32, i32) {
    %c0_i32 = arith.constant 0 : i32
    %c0_i32_0 = arith.constant 0 : i32
    %c0_i32_1 = arith.constant 0 : i32
    return %c0_i32, %c0_i32_0 : i32, i32
  }
  func.func @transform_4(%arg0: i32) -> (i32, i32) {
    %c0_i32 = arith.constant 0 : i32
    %c0_i32_0 = arith.constant 0 : i32
    %c0_i32_1 = arith.constant 0 : i32
    return %c0_i32, %c0_i32_0 : i32, i32
  }
  func.func @transform_5(%arg0: i32) -> (i32, i32) {
    %c0_i32 = arith.constant 0 : i32
    %c0_i32_0 = arith.constant 0 : i32
    %c0_i32_1 = arith.constant 0 : i32
    return %c0_i32, %c0_i32_0 : i32, i32
  }
  func.func @transform_6(%arg0: i32) -> (i32, i32) {
    %c0_i32 = arith.constant 0 : i32
    %c0_i32_0 = arith.constant 0 : i32
    %c0_i32_1 = arith.constant 0 : i32
    return %c0_i32, %c0_i32_0 : i32, i32
  }
  func.func @transform_7(%arg0: i32) -> (i32, i32) {
    %c0_i32 = arith.constant 0 : i32
    %c0_i32_0 = arith.constant 0 : i32
    %c0_i32_1 = arith.constant 0 : i32
    return %c0_i32, %c0_i32_0 : i32, i32
  }
  func.func @transform_8(%arg0: i32) -> (i32, i32) {
    %c0_i32 = arith.constant 0 : i32
    %c0_i32_0 = arith.constant 0 : i32
    %c0_i32_1 = arith.constant 0 : i32
    return %c0_i32, %c0_i32_0 : i32, i32
  }
  func.func @transform_9(%arg0: i32) -> (i32, i32, i32) {
    %c0_i32 = arith.constant 0 : i32
    %c0_i32_0 = arith.constant 0 : i32
    %c0_i32_1 = arith.constant 0 : i32
    return %arg0, %c0_i32, %c0_i32_0 : i32, i32, i32
  }
}

</mosaic_0001>

<llo_original>
// kernel: color_decoder_forward.1
$region0: #{color_decoder_forward.1}
  #allocation0 [shape = 'u32[]', space=smem, size = 0x4, offset = 0x4, fixed_abs, tag = 'smem constant byte address 0x4 - core index']
  #allocation1 [shape = 'u32[144,128]{1,0:T(1,128)}', space=vmem, size = 0x12000, scoped, tag = 'internal scratch']
  %s0 = inlined_call_operand.vmem [shape: bf16[2,72,256], index: 0, kind: input, shape index: {}]
  %s1 = inlined_call_operand.vmem [shape: bf16[256,72], index: 1, kind: input, shape index: {}]
  %s2 = inlined_call_operand.vmem [shape: f32[256,1], index: 2, kind: input, shape index: {}]
  %s3 = inlined_call_operand.hbm [shape: bf16[48,256], index: 3, kind: input, shape index: {}]
  %s4 = inlined_call_operand.vmem [shape: f32[48,1], index: 4, kind: input, shape index: {}]
  %s5 = inlined_call_operand.vmem [shape: f32[256,1], index: 5, kind: input, shape index: {}]
  %s6 = inlined_call_operand.vmem [shape: f32[256,1], index: 6, kind: input, shape index: {}]
  %s7 = inlined_call_operand.vmem [shape: f32[1,256], index: 7, kind: input, shape index: {}]
  %s8 = inlined_call_operand.vmem [shape: f32[1,256], index: 8, kind: input, shape index: {}]
  %s9 = inlined_call_operand.vmem [shape: f32[2,48,256], index: 9, kind: output, shape index: {}]
  %s10 = sld [smem:[#allocation0]]
  $region73: #{color_decoder_forward.1} parent=0
    _
  %s12 = ssub.s32 1, %s10
  %s13 = scalar_select 0, %s12, %s10
  $region1: #{color_decoder_forward.1} parent=0
    #allocation2 [shape = 'u8[24576]{0}', space=vmem, size = 0x6000, scoped, tag = 'input window, operand 3, single buffered']
    #allocation3 [shape = 's32[2]{0}', space=sflag, size = 0x8, scoped, tag = 'scoped memory for color_decoder_forward.1']
    %14 = vsyncpa [#allocation3], 0
    loop: start=0, step=1, limit=4
    $region2: #{color_decoder_forward.1} parent=1 // loop_pre_header
      _
    $region3: #{color_decoder_forward.1} parent=1 // loop_header
      %s16 = sphi 0, %s20
      %p17 = scmp.ge.s32.totalorder %s16, 4
      %s26 = sphi 0, %s28
      %s29 = sphi 0, %s26
      %s30 = sphi 0, %s29
      %s46 = sphi 0, %s30
      %s50 = sphi 0, %s50
      %s52 = sphi 0, %s50
      %s53 = sphi 0, %s52
      %s67 = sphi 0, %s53
      %s71 = sphi 0, %s71
      %s73 = sphi 0, %s71
      %s74 = sphi 0, %s73
      %s88 = sphi 0, %s74
      %s92 = sphi 0, %s92
      %s94 = sphi 0, %s92
      %s95 = sphi 0, %s94
      %s109 = sphi 0, %s95
      %s113 = sphi 0, %s113
      %s115 = sphi 0, %s113
      %s116 = sphi 0, %s115
      %s130 = sphi 0, %s116
      %s134 = sphi 0, %s134
      %s136 = sphi 0, %s134
      %s137 = sphi 0, %s136
      %s151 = sphi 0, %s137
      %s155 = sphi 0, %s155
      %s157 = sphi 0, %s155
      %s158 = sphi 0, %s157
      %s172 = sphi 0, %s158
      %s176 = sphi 0, %s176
      %s178 = sphi 0, %s176
      %s179 = sphi 0, %s178
      %s193 = sphi 0, %s179
      %s197 = sphi 0, %s197
      %s199 = sphi 0, %s197
      %s200 = sphi 0, %s199
      %s214 = sphi 0, %s200
      %s220 = sphi 0, %s222
      %s223 = sphi 0, %s220
      %s224 = sphi 0, %s223
      %s240 = sphi 0, %s224
    $region4: #{color_decoder_forward.1} parent=1 // loop_header_branch
      %19 = sbr.rel (%p17) target = $region8
    $region5: #{color_decoder_forward.1} parent=1 // loop_body
      %s21 = ssub.s32 %s16, 1
      %s22 = ssub.s32 %s16, 2
      %s23 = sadd.s32 %s16, 1
      %s24 = ssub.s32 %s16, %s23
      %p25 = scmp.eq.s32.totalorder %s24, 0
      %s27 = sadd.s32 %s26, 1
      %s28 = scalar_select %p25, %s26, %s27
      %p31 = pneg %p25
      %p32 = scmp.eq.s32.totalorder %s16, 1
      %p33 = por %p31, %p32
      %p34 = scmp.ne.s32.totalorder %s26, %s29
      %p35 = scmp.eq.s32.totalorder %s16, 0
      %p36 = por %p34, %p35
      %p37 = scmp.ne.s32.totalorder %s26, %s29
      %p38 = scmp.eq.s32.totalorder %s21, 1
      %p39 = por %p37, %p38
      %p40 = scmp.ne.s32.totalorder %s29, %s30
      %p41 = scmp.eq.s32.totalorder %s21, 0
      %p42 = por %p40, %p41
      %p43 = scmp.ne.s32.totalorder %s29, %s30
      %p44 = scmp.eq.s32.totalorder %s22, 1
      %p45 = por %p43, %p44
      %p47 = scmp.ne.s32.totalorder %s30, %s46
      %p48 = scmp.eq.s32.totalorder %s22, 0
      %p49 = por %p47, %p48
      %s51 = sadd.s32 %s50, 1
      %p54 = scmp.eq.s32.totalorder %s16, 1
      %p55 = scmp.ne.s32.totalorder %s50, %s52
      %p56 = scmp.eq.s32.totalorder %s16, 0
      %p57 = por %p55, %p56
      %p58 = scmp.ne.s32.totalorder %s50, %s52
      %p59 = scmp.eq.s32.totalorder %s21, 1
      %p60 = por %p58, %p59
      %p61 = scmp.ne.s32.totalorder %s52, %s53
      %p62 = scmp.eq.s32.totalorder %s21, 0
      %p63 = por %p61, %p62
      %p64 = scmp.ne.s32.totalorder %s52, %s53
      %p65 = scmp.eq.s32.totalorder %s22, 1
      %p66 = por %p64, %p65
      %p68 = scmp.ne.s32.totalorder %s53, %s67
      %p69 = scmp.eq.s32.totalorder %s22, 0
      %p70 = por %p68, %p69
      %s72 = sadd.s32 %s71, 1
      %p75 = scmp.eq.s32.totalorder %s16, 1
      %p76 = scmp.ne.s32.totalorder %s71, %s73
      %p77 = scmp.eq.s32.totalorder %s16, 0
      %p78 = por %p76, %p77
      %p79 = scmp.ne.s32.totalorder %s71, %s73
      %p80 = scmp.eq.s32.totalorder %s21, 1
      %p81 = por %p79, %p80
      %p82 = scmp.ne.s32.totalorder %s73, %s74
      %p83 = scmp.eq.s32.totalorder %s21, 0
      %p84 = por %p82, %p83
      %p85 = scmp.ne.s32.totalorder %s73, %s74
      %p86 = scmp.eq.s32.totalorder %s22, 1
      %p87 = por %p85, %p86
      %p89 = scmp.ne.s32.totalorder %s74, %s88
      %p90 = scmp.eq.s32.totalorder %s22, 0
      %p91 = por %p89, %p90
      %s93 = sadd.s32 %s92, 1
      %p96 = scmp.eq.s32.totalorder %s16, 1
      %p97 = scmp.ne.s32.totalorder %s92, %s94
      %p98 = scmp.eq.s32.totalorder %s16, 0
      %p99 = por %p97, %p98
      %p100 = scmp.ne.s32.totalorder %s92, %s94
      %p101 = scmp.eq.s32.totalorder %s21, 1
      %p102 = por %p100, %p101
      %p103 = scmp.ne.s32.totalorder %s94, %s95
      %p104 = scmp.eq.s32.totalorder %s21, 0
      %p105 = por %p103, %p104
      %p106 = scmp.ne.s32.totalorder %s94, %s95
      %p107 = scmp.eq.s32.totalorder %s22, 1
      %p108 = por %p106, %p107
      %p110 = scmp.ne.s32.totalorder %s95, %s109
      %p111 = scmp.eq.s32.totalorder %s22, 0
      %p112 = por %p110, %p111
      %s114 = sadd.s32 %s113, 1
      %p117 = scmp.eq.s32.totalorder %s16, 1
      %p118 = scmp.ne.s32.totalorder %s113, %s115
      %p119 = scmp.eq.s32.totalorder %s16, 0
      %p120 = por %p118, %p119
      %p121 = scmp.ne.s32.totalorder %s113, %s115
      %p122 = scmp.eq.s32.totalorder %s21, 1
      %p123 = por %p121, %p122
      %p124 = scmp.ne.s32.totalorder %s115, %s116
      %p125 = scmp.eq.s32.totalorder %s21, 0
      %p126 = por %p124, %p125
      %p127 = scmp.ne.s32.totalorder %s115, %s116
      %p128 = scmp.eq.s32.totalorder %s22, 1
      %p129 = por %p127, %p128
      %p131 = scmp.ne.s32.totalorder %s116, %s130
      %p132 = scmp.eq.s32.totalorder %s22, 0
      %p133 = por %p131, %p132
      %s135 = sadd.s32 %s134, 1
      %p138 = scmp.eq.s32.totalorder %s16, 1
      %p139 = scmp.ne.s32.totalorder %s134, %s136
      %p140 = scmp.eq.s32.totalorder %s16, 0
      %p141 = por %p139, %p140
      %p142 = scmp.ne.s32.totalorder %s134, %s136
      %p143 = scmp.eq.s32.totalorder %s21, 1
      %p144 = por %p142, %p143
      %p145 = scmp.ne.s32.totalorder %s136, %s137
      %p146 = scmp.eq.s32.totalorder %s21, 0
      %p147 = por %p145, %p146
      %p148 = scmp.ne.s32.totalorder %s136, %s137
      %p149 = scmp.eq.s32.totalorder %s22, 1
      %p150 = por %p148, %p149
      %p152 = scmp.ne.s32.totalorder %s137, %s151
      %p153 = scmp.eq.s32.totalorder %s22, 0
      %p154 = por %p152, %p153
      %s156 = sadd.s32 %s155, 1
      %p159 = scmp.eq.s32.totalorder %s16, 1
      %p160 = scmp.ne.s32.totalorder %s155, %s157
      %p161 = scmp.eq.s32.totalorder %s16, 0
      %p162 = por %p160, %p161
      %p163 = scmp.ne.s32.totalorder %s155, %s157
      %p164 = scmp.eq.s32.totalorder %s21, 1
      %p165 = por %p163, %p164
      %p166 = scmp.ne.s32.totalorder %s157, %s158
      %p167 = scmp.eq.s32.totalorder %s21, 0
      %p168 = por %p166, %p167
      %p169 = scmp.ne.s32.totalorder %s157, %s158
      %p170 = scmp.eq.s32.totalorder %s22, 1
      %p171 = por %p169, %p170
      %p173 = scmp.ne.s32.totalorder %s158, %s172
      %p174 = scmp.eq.s32.totalorder %s22, 0
      %p175 = por %p173, %p174
      %s177 = sadd.s32 %s176, 1
      %p180 = scmp.eq.s32.totalorder %s16, 1
      %p181 = scmp.ne.s32.totalorder %s176, %s178
      %p182 = scmp.eq.s32.totalorder %s16, 0
      %p183 = por %p181, %p182
      %p184 = scmp.ne.s32.totalorder %s176, %s178
      %p185 = scmp.eq.s32.totalorder %s21, 1
      %p186 = por %p184, %p185
      %p187 = scmp.ne.s32.totalorder %s178, %s179
      %p188 = scmp.eq.s32.totalorder %s21, 0
      %p189 = por %p187, %p188
      %p190 = scmp.ne.s32.totalorder %s178, %s179
      %p191 = scmp.eq.s32.totalorder %s22, 1
      %p192 = por %p190, %p191
      %p194 = scmp.ne.s32.totalorder %s179, %s193
      %p195 = scmp.eq.s32.totalorder %s22, 0
      %p196 = por %p194, %p195
      %s198 = sadd.s32 %s197, 1
      %p201 = scmp.eq.s32.totalorder %s16, 1
      %p202 = scmp.ne.s32.totalorder %s197, %s199
      %p203 = scmp.eq.s32.totalorder %s16, 0
      %p204 = por %p202, %p203
      %p205 = scmp.ne.s32.totalorder %s197, %s199
      %p206 = scmp.eq.s32.totalorder %s21, 1
      %p207 = por %p205, %p206
      %p208 = scmp.ne.s32.totalorder %s199, %s200
      %p209 = scmp.eq.s32.totalorder %s21, 0
      %p210 = por %p208, %p209
      %p211 = scmp.ne.s32.totalorder %s199, %s200
      %p212 = scmp.eq.s32.totalorder %s22, 1
      %p213 = por %p211, %p212
      %p215 = scmp.ne.s32.totalorder %s200, %s214
      %p216 = scmp.eq.s32.totalorder %s22, 0
      %p217 = por %p215, %p216
      %s218 = ssub.s32 %s16, %s23
      %p219 = scmp.eq.s32.totalorder %s218, 0
      %s221 = sadd.s32 %s220, 1
      %s222 = scalar_select %p219, %s220, %s221
      %p225 = pneg %p219
      %p226 = scmp.eq.s32.totalorder %s16, 1
      %p227 = por %p225, %p226
      %p228 = scmp.ne.s32.totalorder %s220, %s223
      %p229 = scmp.eq.s32.totalorder %s16, 0
      %p230 = por %p228, %p229
      %p231 = scmp.ne.s32.totalorder %s220, %s223
      %p232 = scmp.eq.s32.totalorder %s21, 1
      %p233 = por %p231, %p232
      %p234 = scmp.ne.s32.totalorder %s223, %s224
      %p235 = scmp.eq.s32.totalorder %s21, 0
      %p236 = por %p234, %p235
      %p237 = scmp.ne.s32.totalorder %s223, %s224
      %p238 = scmp.eq.s32.totalorder %s22, 1
      %p239 = por %p237, %p238
      %p241 = scmp.ne.s32.totalorder %s224, %s240
      %p242 = scmp.eq.s32.totalorder %s22, 0
      %p243 = por %p241, %p242
      %p244 = scmp.le.s32.totalorder 1, %s16
      %p245 = scmp.lt.s32.totalorder %s16, 3
      %p246 = pnand %p244, %p245
      %p247 = pneg %p246
      // Predicated region
      $region9: #{color_decoder_forward.1} parent=5 // pred_check
        _
      $region10: #{color_decoder_forward.1} parent=5 // pred_check_branch
        %249 = sbr.rel (%p246) target = $region12
      $region11: #{color_decoder_forward.1} parent=5 // pred_region
        %s250 = ssub.s32 %s16, 1
        // Predicated region
        $region13: #{color_decoder_forward.1} parent=11 // pred_check
          %p251 = pneg %p63
        $region14: #{color_decoder_forward.1} parent=11 // pred_check_branch
          %253 = sbr.rel (%p251) target = $region16
        $region15: #{color_decoder_forward.1} parent=11 // pred_region
          _
        $region16: #{color_decoder_forward.1} parent=11 // pred_fallthru
          _
        // Predicated region
        $region17: #{color_decoder_forward.1} parent=11 // pred_check
          %p254 = pneg %p84
        $region18: #{color_decoder_forward.1} parent=11 // pred_check_branch
          %256 = sbr.rel (%p254) target = $region20
        $region19: #{color_decoder_forward.1} parent=11 // pred_region
          _
        $region20: #{color_decoder_forward.1} parent=11 // pred_fallthru
          _
        // Predicated region
        $region21: #{color_decoder_forward.1} parent=11 // pred_check
          %p257 = pneg %p105
        $region22: #{color_decoder_forward.1} parent=11 // pred_check_branch
          %259 = sbr.rel (%p257) target = $region24
        $region23: #{color_decoder_forward.1} parent=11 // pred_region
          %s261 = ssub.s32 768, 768
          %262 = vsyncadd [#allocation3], %s261
          %s263 = sshll.u32 [#allocation2], 4
          %s264 = int_to_ptr.vmem [resolvable:$true] %s263
          %269 = dma.hbm_to_vmem [thread:$0]  %s3, 768, %s264, [#allocation3], 128, 128, 8
        $region24: #{color_decoder_forward.1} parent=11 // pred_fallthru
          _
        // Predicated region
        $region25: #{color_decoder_forward.1} parent=11 // pred_check
          %p270 = pneg %p126
        $region26: #{color_decoder_forward.1} parent=11 // pred_check_branch
          %272 = sbr.rel (%p270) target = $region28
        $region27: #{color_decoder_forward.1} parent=11 // pred_region
          _
        $region28: #{color_decoder_forward.1} parent=11 // pred_fallthru
          _
        // Predicated region
        $region29: #{color_decoder_forward.1} parent=11 // pred_check
          %p273 = pneg %p147
        $region30: #{color_decoder_forward.1} parent=11 // pred_check_branch
          %275 = sbr.rel (%p273) target = $region32
        $region31: #{color_decoder_forward.1} parent=11 // pred_region
          _
        $region32: #{color_decoder_forward.1} parent=11 // pred_fallthru
          _
        // Predicated region
        $region33: #{color_decoder_forward.1} parent=11 // pred_check
          %p276 = pneg %p168
        $region34: #{color_decoder_forward.1} parent=11 // pred_check_branch
          %278 = sbr.rel (%p276) target = $region36
        $region35: #{color_decoder_forward.1} parent=11 // pred_region
          _
        $region36: #{color_decoder_forward.1} parent=11 // pred_fallthru
          _
        // Predicated region
        $region37: #{color_decoder_forward.1} parent=11 // pred_check
          %p279 = pneg %p189
        $region38: #{color_decoder_forward.1} parent=11 // pred_check_branch
          %281 = sbr.rel (%p279) target = $region40
        $region39: #{color_decoder_forward.1} parent=11 // pred_region
          _
        $region40: #{color_decoder_forward.1} parent=11 // pred_fallthru
          _
        // Predicated region
        $region41: #{color_decoder_forward.1} parent=11 // pred_check
          %p282 = pneg %p210
        $region42: #{color_decoder_forward.1} parent=11 // pred_check_branch
          %284 = sbr.rel (%p282) target = $region44
        $region43: #{color_decoder_forward.1} parent=11 // pred_region
          _
        $region44: #{color_decoder_forward.1} parent=11 // pred_fallthru
          _
      $region12: #{color_decoder_forward.1} parent=5 // pred_fallthru
        _
      %p285 = scmp.lt.s32.totalorder %s16, 2
      // Predicated region
      $region45: #{color_decoder_forward.1} parent=5 // pred_check
        %p286 = pneg %p285
      $region46: #{color_decoder_forward.1} parent=5 // pred_check_branch
        %288 = sbr.rel (%p286) target = $region48
      $region47: #{color_decoder_forward.1} parent=5 // pred_region
        // Predicated region
        $region49: #{color_decoder_forward.1} parent=47 // pred_check
          %p289 = pneg %p36
        $region50: #{color_decoder_forward.1} parent=47 // pred_check_branch
          %291 = sbr.rel (%p289) target = $region52
        $region51: #{color_decoder_forward.1} parent=47 // pred_region
          %p292 = scmp.lt.s32.totalorder %s16, 1
          %s293 = scalar_select %p292, %s16, 1
          %s294 = smul.addr %s293, 18
          %s295 = smul.addr %s294, 4
          %s296 = scalar_lea.vmem %s0, %s295
        $region52: #{color_decoder_forward.1} parent=47 // pred_fallthru
          _
      $region48: #{color_decoder_forward.1} parent=5 // pred_fallthru
        _
      %p297 = scmp.le.s32.totalorder 1, %s16
      %p298 = scmp.lt.s32.totalorder %s16, 3
      %p299 = pnand %p297, %p298
      %p300 = pneg %p299
      // Predicated region
      $region53: #{color_decoder_forward.1} parent=5 // pred_check
        _
      $region54: #{color_decoder_forward.1} parent=5 // pred_check_branch
        %302 = sbr.rel (%p299) target = $region56
      $region55: #{color_decoder_forward.1} parent=5 // pred_region
        %s303 = ssub.s32 %s16, 1
        // Predicated region
        $region57: #{color_decoder_forward.1} parent=55 // pred_check
          %p304 = pneg %p105
        $region58: #{color_decoder_forward.1} parent=55 // pred_check_branch
          %306 = sbr.rel (%p304) target = $region60
        $region59: #{color_decoder_forward.1} parent=55 // pred_region
          %307 = dma.done [#allocation3], 768
        $region60: #{color_decoder_forward.1} parent=55 // pred_fallthru
          _
        %p308 = scmp.lt.s32.totalorder %s21, 1
        %s309 = scalar_select %p308, %s21, 1
        %s310 = smul.addr %s309, 18
        %s311 = smul.addr %s310, 4
        %s312 = scalar_lea.vmem %s0, %s311
        %p313 = pneg %p42
        %p314 = pneg %p39
        %p315 = pneg %p63
        %p316 = pneg %p60
        %p317 = pneg %p84
        %p318 = pneg %p81
        %p319 = pneg %p105
        %p320 = pneg %p102
        %p321 = pneg %p126
        %p322 = pneg %p123
        %p323 = pneg %p147
        %p324 = pneg %p144
        %p325 = pneg %p168
        %p326 = pneg %p165
        %p327 = pneg %p189
        %p328 = pneg %p186
        %p329 = pneg %p210
        %p330 = pneg %p207
        %p331 = pneg %p236
        %p332 = pneg %p233
        %p333 = scmp.lt.s32.totalorder %s21, 1
        %s334 = scalar_select %p333, %s21, 1
        %s335 = smul.addr %s334, 12
        %s336 = smul.addr %s335, 8
        %s337 = scalar_lea.vmem %s9, %s336
        %p338 = scmp.lt.s32.totalorder %s21, 1
        %s339 = scalar_select %p338, %s21, 1
        %s340 = smul.addr %s339, 18
        %s341 = smul.addr %s340, 4
        %s342 = scalar_lea.vmem %s0, %s341
        %p343 = scmp.lt.s32.totalorder %s21, 1
        %s344 = scalar_select %p343, %s21, 1
        %s345 = smul.addr %s344, 12
        %s346 = smul.addr %s345, 8
        %s347 = scalar_lea.vmem %s9, %s346
        %v349 = vld [vmem:[%s1] sm:$0xf]
        %v350 = vld [vmem:[%s1 + $0x4] sm:$0xf]
        %v351 = vld [vmem:[%s1 + $0x8] sm:$0xf]
        %v352 = vld [vmem:[%s1 + $0xc] sm:$0xf]
        %v353 = vld [vmem:[%s1 + $0x10] sm:$0xf]
        %v354 = vld [vmem:[%s1 + $0x14] sm:$0xf]
        %v355 = vld [vmem:[%s1 + $0x18] sm:$0xf]
        %v356 = vld [vmem:[%s1 + $0x1c] sm:$0xf]
        %v357 = vld [vmem:[%s1 + $0x20] sm:$0xf]
        %v358 = vld [vmem:[%s1 + $0x24] sm:$0xf]
        %v359 = vld [vmem:[%s1 + $0x28] sm:$0xf]
        %v360 = vld [vmem:[%s1 + $0x2c] sm:$0xf]
        %v361 = vld [vmem:[%s1 + $0x30] sm:$0xf]
        %v362 = vld [vmem:[%s1 + $0x34] sm:$0xf]
        %v363 = vld [vmem:[%s1 + $0x38] sm:$0xf]
        %v364 = vld [vmem:[%s1 + $0x3c] sm:$0xf]
        %v365 = vld [vmem:[%s1 + $0x40] sm:$0xf]
        %v366 = vld [vmem:[%s1 + $0x44] sm:$0xf]
        %v367 = vld [vmem:[%s1 + $0x48] sm:$0xf]
        %v368 = vld [vmem:[%s1 + $0x4c] sm:$0xf]
        %v369 = vld [vmem:[%s1 + $0x50] sm:$0xf]
        %v370 = vld [vmem:[%s1 + $0x54] sm:$0xf]
        %v371 = vld [vmem:[%s1 + $0x58] sm:$0xf]
        %v372 = vld [vmem:[%s1 + $0x5c] sm:$0xf]
        %v373 = vld [vmem:[%s1 + $0x60] sm:$0xf]
        %v374 = vld [vmem:[%s1 + $0x64] sm:$0xf]
        %v375 = vld [vmem:[%s1 + $0x68] sm:$0xf]
        %v376 = vld [vmem:[%s1 + $0x6c] sm:$0xf]
        %v377 = vld [vmem:[%s1 + $0x70] sm:$0xf]
        %v378 = vld [vmem:[%s1 + $0x74] sm:$0xf]
        %v379 = vld [vmem:[%s1 + $0x78] sm:$0xf]
        %v380 = vld [vmem:[%s1 + $0x7c] sm:$0xf]
        %v381 = vld [vmem:[%s342] sm:$0xff]
        %v382 = vld [vmem:[%s342 + $0x8] sm:$0xff]
        %v383 = vld [vmem:[%s342 + $0x10] sm:$0xff]
        %v384 = vld [vmem:[%s342 + $0x18] sm:$0xff]
        %v385 = vld [vmem:[%s342 + $0x20] sm:$0xff]
        %v386 = vld [vmem:[%s342 + $0x28] sm:$0xff]
        %v387 = vld [vmem:[%s342 + $0x30] sm:$0xff]
        %v388 = vld [vmem:[%s342 + $0x38] sm:$0xff]
        %v389 = vld [vmem:[%s342 + $0x40] sm:$0xff]
        %v390 = vld [vmem:[%s2] sm:$0xff]
        %v391 = vld [vmem:[%s2 + $0x8] sm:$0xff]
        %v392 = vld [vmem:[%s2 + $0x10] sm:$0xff]
        %v393 = vld [vmem:[%s2 + $0x18] sm:$0xff]
        %v394 = vld [vmem:[%s2 + $0x20] sm:$0xff]
        %v395 = vld [vmem:[%s2 + $0x28] sm:$0xff]
        %v396 = vld [vmem:[%s2 + $0x30] sm:$0xff]
        %v397 = vld [vmem:[%s2 + $0x38] sm:$0xff]
        %v398 = vld [vmem:[%s2 + $0x40] sm:$0xff]
        %v399 = vld [vmem:[%s2 + $0x48] sm:$0xff]
        %v400 = vld [vmem:[%s2 + $0x50] sm:$0xff]
        %v401 = vld [vmem:[%s2 + $0x58] sm:$0xff]
        %v402 = vld [vmem:[%s2 + $0x60] sm:$0xff]
        %v403 = vld [vmem:[%s2 + $0x68] sm:$0xff]
        %v404 = vld [vmem:[%s2 + $0x70] sm:$0xff]
        %v405 = vld [vmem:[%s2 + $0x78] sm:$0xff]
        %v406 = vld [vmem:[%s2 + $0x80] sm:$0xff]
        %v407 = vld [vmem:[%s2 + $0x88] sm:$0xff]
        %v408 = vld [vmem:[%s2 + $0x90] sm:$0xff]
        %v409 = vld [vmem:[%s2 + $0x98] sm:$0xff]
        %v410 = vld [vmem:[%s2 + $0xa0] sm:$0xff]
        %v411 = vld [vmem:[%s2 + $0xa8] sm:$0xff]
        %v412 = vld [vmem:[%s2 + $0xb0] sm:$0xff]
        %v413 = vld [vmem:[%s2 + $0xb8] sm:$0xff]
        %v414 = vld [vmem:[%s2 + $0xc0] sm:$0xff]
        %v415 = vld [vmem:[%s2 + $0xc8] sm:$0xff]
        %v416 = vld [vmem:[%s2 + $0xd0] sm:$0xff]
        %v417 = vld [vmem:[%s2 + $0xd8] sm:$0xff]
        %v418 = vld [vmem:[%s2 + $0xe0] sm:$0xff]
        %v419 = vld [vmem:[%s2 + $0xe8] sm:$0xff]
        %v420 = vld [vmem:[%s2 + $0xf0] sm:$0xff]
        %v421 = vld [vmem:[%s2 + $0xf8] sm:$0xff]
        %423 = vset.pattern.permute.xlu0 0
        %424 = vperm.xlu0 %423, %v390
        %v425 = vpop.permute.xlu0 %424
        %428 = vset.pattern.permute.xlu0 0
        %429 = vperm.xlu0 %428, %v391
        %v430 = vpop.permute.xlu0 %429
        %433 = vset.pattern.permute.xlu0 0
        %434 = vperm.xlu0 %433, %v392
        %v435 = vpop.permute.xlu0 %434
        %438 = vset.pattern.permute.xlu0 0
        %439 = vperm.xlu0 %438, %v393
        %v440 = vpop.permute.xlu0 %439
        %443 = vset.pattern.permute.xlu0 0
        %444 = vperm.xlu0 %443, %v394
        %v445 = vpop.permute.xlu0 %444
        %448 = vset.pattern.permute.xlu0 0
        %449 = vperm.xlu0 %448, %v395
        %v450 = vpop.permute.xlu0 %449
        %453 = vset.pattern.permute.xlu0 0
        %454 = vperm.xlu0 %453, %v396
        %v455 = vpop.permute.xlu0 %454
        %458 = vset.pattern.permute.xlu0 0
        %459 = vperm.xlu0 %458, %v397
        %v460 = vpop.permute.xlu0 %459
        %463 = vset.pattern.permute.xlu0 0
        %464 = vperm.xlu0 %463, %v398
        %v465 = vpop.permute.xlu0 %464
        %468 = vset.pattern.permute.xlu0 0
        %469 = vperm.xlu0 %468, %v399
        %v470 = vpop.permute.xlu0 %469
        %473 = vset.pattern.permute.xlu0 0
        %474 = vperm.xlu0 %473, %v400
        %v475 = vpop.permute.xlu0 %474
        %478 = vset.pattern.permute.xlu0 0
        %479 = vperm.xlu0 %478, %v401
        %v480 = vpop.permute.xlu0 %479
        %483 = vset.pattern.permute.xlu0 0
        %484 = vperm.xlu0 %483, %v402
        %v485 = vpop.permute.xlu0 %484
        %488 = vset.pattern.permute.xlu0 0
        %489 = vperm.xlu0 %488, %v403
        %v490 = vpop.permute.xlu0 %489
        %493 = vset.pattern.permute.xlu0 0
        %494 = vperm.xlu0 %493, %v404
        %v495 = vpop.permute.xlu0 %494
        %498 = vset.pattern.permute.xlu0 0
        %499 = vperm.xlu0 %498, %v405
        %v500 = vpop.permute.xlu0 %499
        %503 = vset.pattern.permute.xlu0 0
        %504 = vperm.xlu0 %503, %v406
        %v505 = vpop.permute.xlu0 %504
        %508 = vset.pattern.permute.xlu0 0
        %509 = vperm.xlu0 %508, %v407
        %v510 = vpop.permute.xlu0 %509
        %513 = vset.pattern.permute.xlu0 0
        %514 = vperm.xlu0 %513, %v408
        %v515 = vpop.permute.xlu0 %514
        %518 = vset.pattern.permute.xlu0 0
        %519 = vperm.xlu0 %518, %v409
        %v520 = vpop.permute.xlu0 %519
        %523 = vset.pattern.permute.xlu0 0
        %524 = vperm.xlu0 %523, %v410
        %v525 = vpop.permute.xlu0 %524
        %528 = vset.pattern.permute.xlu0 0
        %529 = vperm.xlu0 %528, %v411
        %v530 = vpop.permute.xlu0 %529
        %533 = vset.pattern.permute.xlu0 0
        %534 = vperm.xlu0 %533, %v412
        %v535 = vpop.permute.xlu0 %534
        %538 = vset.pattern.permute.xlu0 0
        %539 = vperm.xlu0 %538, %v413
        %v540 = vpop.permute.xlu0 %539
        %543 = vset.pattern.permute.xlu0 0
        %544 = vperm.xlu0 %543, %v414
        %v545 = vpop.permute.xlu0 %544
        %548 = vset.pattern.permute.xlu0 0
        %549 = vperm.xlu0 %548, %v415
        %v550 = vpop.permute.xlu0 %549
        %553 = vset.pattern.permute.xlu0 0
        %554 = vperm.xlu0 %553, %v416
        %v555 = vpop.permute.xlu0 %554
        %558 = vset.pattern.permute.xlu0 0
        %559 = vperm.xlu0 %558, %v417
        %v560 = vpop.permute.xlu0 %559
        %563 = vset.pattern.permute.xlu0 0
        %564 = vperm.xlu0 %563, %v418
        %v565 = vpop.permute.xlu0 %564
        %568 = vset.pattern.permute.xlu0 0
        %569 = vperm.xlu0 %568, %v419
        %v570 = vpop.permute.xlu0 %569
        %573 = vset.pattern.permute.xlu0 0
        %574 = vperm.xlu0 %573, %v420
        %v575 = vpop.permute.xlu0 %574
        %578 = vset.pattern.permute.xlu0 0
        %579 = vperm.xlu0 %578, %v421
        %v580 = vpop.permute.xlu0 %579
        %v614 = vunpack.c.l.b16 %v349
        %v615 = vunpack.c.l.b16 %v350
        %v616 = vunpack.c.l.b16 %v351
        %v617 = vunpack.c.l.b16 %v352
        %v618 = vunpack.c.l.b16 %v353
        %v619 = vunpack.c.l.b16 %v354
        %v620 = vunpack.c.l.b16 %v355
        %v621 = vunpack.c.l.b16 %v356
        %v622 = vunpack.c.l.b16 %v357
        %v623 = vunpack.c.l.b16 %v358
        %v624 = vunpack.c.l.b16 %v359
        %v625 = vunpack.c.l.b16 %v360
        %v626 = vunpack.c.l.b16 %v361
        %v627 = vunpack.c.l.b16 %v362
        %v628 = vunpack.c.l.b16 %v363
        %v629 = vunpack.c.l.b16 %v364
        %v630 = vunpack.c.l.b16 %v365
        %v631 = vunpack.c.l.b16 %v366
        %v632 = vunpack.c.l.b16 %v367
        %v633 = vunpack.c.l.b16 %v368
        %v634 = vunpack.c.l.b16 %v369
        %v635 = vunpack.c.l.b16 %v370
        %v636 = vunpack.c.l.b16 %v371
        %v637 = vunpack.c.l.b16 %v372
        %v638 = vunpack.c.l.b16 %v373
        %v639 = vunpack.c.l.b16 %v374
        %v640 = vunpack.c.l.b16 %v375
        %v641 = vunpack.c.l.b16 %v376
        %v642 = vunpack.c.l.b16 %v377
        %v643 = vunpack.c.l.b16 %v378
        %v644 = vunpack.c.l.b16 %v379
        %v645 = vunpack.c.l.b16 %v380
        %v646 = vpack.c.b16 %v615, %v614
        %v647 = vpack.c.b16 %v617, %v616
        %v648 = vpack.c.b16 %v619, %v618
        %v649 = vpack.c.b16 %v621, %v620
        %v650 = vpack.c.b16 %v623, %v622
        %v651 = vpack.c.b16 %v625, %v624
        %v652 = vpack.c.b16 %v627, %v626
        %v653 = vpack.c.b16 %v629, %v628
        %v654 = vpack.c.b16 %v631, %v630
        %v655 = vpack.c.b16 %v633, %v632
        %v656 = vpack.c.b16 %v635, %v634
        %v657 = vpack.c.b16 %v637, %v636
        %v658 = vpack.c.b16 %v639, %v638
        %v659 = vpack.c.b16 %v641, %v640
        %v660 = vpack.c.b16 %v643, %v642
        %v661 = vpack.c.b16 %v645, %v644
        %v671 = vunpack.c.l.b16 %v381
        %v672 = vunpack.c.h.b16 %v381
        %v673 = vunpack.c.l.b16 %v382
        %v674 = vunpack.c.h.b16 %v382
        %v675 = vunpack.c.l.b16 %v383
        %v676 = vunpack.c.h.b16 %v383
        %v677 = vunpack.c.l.b16 %v384
        %v678 = vunpack.c.h.b16 %v384
        %v679 = vunpack.c.l.b16 %v385
        %v680 = vunpack.c.h.b16 %v385
        %v681 = vunpack.c.l.b16 %v386
        %v682 = vunpack.c.h.b16 %v386
        %v683 = vunpack.c.l.b16 %v387
        %v684 = vunpack.c.h.b16 %v387
        %v685 = vunpack.c.l.b16 %v388
        %v686 = vunpack.c.h.b16 %v388
        %v687 = vunpack.c.l.b16 %v389
        %v688 = vunpack.c.h.b16 %v389
        %v689 = vpack.c.b16 %v673, %v671
        %v690 = vpack.c.b16 %v674, %v672
        %v691 = vpack.c.b16 %v677, %v675
        %v692 = vpack.c.b16 %v678, %v676
        %v693 = vpack.c.b16 %v681, %v679
        %v694 = vpack.c.b16 %v682, %v680
        %v695 = vpack.c.b16 %v685, %v683
        %v696 = vpack.c.b16 %v686, %v684
        %v697 = vpack.c.b16 %v687, %v687
        %v698 = vpack.c.b16 %v688, %v688
        %vm707 = vcmask 588800
        %v709 = vsel %vm707, %v646, 0
        %v712 = vsel %vm707, %v647, 0
        %v715 = vsel %vm707, %v648, 0
        %v718 = vsel %vm707, %v649, 0
        %v721 = vsel %vm707, %v650, 0
        %v724 = vsel %vm707, %v651, 0
        %v727 = vsel %vm707, %v652, 0
        %v730 = vsel %vm707, %v653, 0
        %v733 = vsel %vm707, %v654, 0
        %v736 = vsel %vm707, %v655, 0
        %v739 = vsel %vm707, %v656, 0
        %v742 = vsel %vm707, %v657, 0
        %v745 = vsel %vm707, %v658, 0
        %v748 = vsel %vm707, %v659, 0
        %v751 = vsel %vm707, %v660, 0
        %v754 = vsel %vm707, %v661, 0
        %vm756 = vcmask 1043456
        %v758 = vsel %vm756, %v697, 0
        %v761 = vsel %vm756, %v698, 0
        %763 = vmatprep.subr.bf16.mxu0 %v690
        %764 = vmatpush1.bf16.msra.mxu0 %v689
        %765 = vmatprep.subr.bf16.mxu0 %v692
        %766 = vmatpush1.bf16.msra.mxu0 %v691
        %767 = vmatprep.subr.bf16.mxu0 %v694
        %768 = vmatpush1.bf16.msra.mxu0 %v693
        %769 = vmatprep.subr.bf16.mxu0 %v696
        %770 = vmatpush1.bf16.msra.mxu0 %v695
        %771 = vmatprep.subr.bf16.mxu0 %v761
        %772 = vmatpush1.bf16.msra.mxu0 %v758
        %773 = vmatprep.subr.bf16.mxu0 0
        %774 = vmatpush1.bf16.msra.mxu0 0
        %775 = vmatprep.subr.bf16.mxu0 0
        %776 = vmatpush1.bf16.msra.mxu0 0
        %777 = vmatprep.subr.bf16.mxu0 0
        %778 = vmatpush1.bf16.msra.mxu0 0
        %779 = vmatprep.subr.bf16.mxu0 0
        %780 = vmatpush1.bf16.msra.mxu0 0
        %781 = vmatprep.subr.bf16.mxu0 0
        %782 = vmatpush1.bf16.msra.mxu0 0
        %783 = vmatprep.subr.bf16.mxu0 0
        %784 = vmatpush1.bf16.msra.mxu0 0
        %785 = vmatprep.subr.bf16.mxu0 0
        %786 = vmatpush1.bf16.msra.mxu0 0
        %787 = vmatprep.subr.bf16.mxu0 0
        %788 = vmatpush1.bf16.msra.mxu0 0
        %789 = vmatprep.subr.bf16.mxu0 0
        %790 = vmatpush1.bf16.msra.mxu0 0
        %791 = vmatprep.subr.bf16.mxu0 0
        %792 = vmatpush1.bf16.msra.mxu0 0
        %793 = vmatprep.subr.bf16.mxu0 0
        %794 = vmatpush1.bf16.msra.mxu0 0
        %795 = vmatprep.mubr.bf16.mxu0 0
        %796 = vmatmul.mubr.bf16.gmra.mrb[0].mxu0 %v709
        %v797 = vpop.f32.mrb[0].mxu0
        %v798 = vadd.f32 %v425, %v797
        %v799 = vpop.f32.mrb[0].mxu0
        %v800 = vadd.f32 %v425, %v799
        %v801 = vpop.f32.mrb[0].mxu0
        %v802 = vadd.f32 %v430, %v801
        %v803 = vpop.f32.mrb[0].mxu0
        %v804 = vadd.f32 %v430, %v803
        %805 = vmatprep.mubr.bf16.mxu0 0
        %806 = vmatmul.mubr.bf16.gmra.mrb[0].mxu0 %v712
        %v807 = vpop.f32.mrb[0].mxu0
        %v808 = vadd.f32 %v435, %v807
        %v809 = vpop.f32.mrb[0].mxu0
        %v810 = vadd.f32 %v435, %v809
        %v811 = vpop.f32.mrb[0].mxu0
        %v812 = vadd.f32 %v440, %v811
        %v813 = vpop.f32.mrb[0].mxu0
        %v814 = vadd.f32 %v440, %v813
        %815 = vmatprep.mubr.bf16.mxu0 0
        %816 = vmatmul.mubr.bf16.gmra.mrb[0].mxu0 %v715
        %v817 = vpop.f32.mrb[0].mxu0
        %v818 = vadd.f32 %v445, %v817
        %v819 = vpop.f32.mrb[0].mxu0
        %v820 = vadd.f32 %v445, %v819
        %v821 = vpop.f32.mrb[0].mxu0
        %v822 = vadd.f32 %v450, %v821
        %v823 = vpop.f32.mrb[0].mxu0
        %v824 = vadd.f32 %v450, %v823
        %825 = vmatprep.mubr.bf16.mxu0 0
        %826 = vmatmul.mubr.bf16.gmra.mrb[0].mxu0 %v718
        %v827 = vpop.f32.mrb[0].mxu0
        %v828 = vadd.f32 %v455, %v827
        %v829 = vpop.f32.mrb[0].mxu0
        %v830 = vadd.f32 %v455, %v829
        %v831 = vpop.f32.mrb[0].mxu0
        %v832 = vadd.f32 %v460, %v831
        %v833 = vpop.f32.mrb[0].mxu0
        %v834 = vadd.f32 %v460, %v833
        %835 = vmatprep.mubr.bf16.mxu0 0
        %836 = vmatmul.mubr.bf16.gmra.mrb[0].mxu0 %v721
        %v837 = vpop.f32.mrb[0].mxu0
        %v838 = vadd.f32 %v465, %v837
        %v839 = vpop.f32.mrb[0].mxu0
        %v840 = vadd.f32 %v465, %v839
        %v841 = vpop.f32.mrb[0].mxu0
        %v842 = vadd.f32 %v470, %v841
        %v843 = vpop.f32.mrb[0].mxu0
        %v844 = vadd.f32 %v470, %v843
        %845 = vmatprep.mubr.bf16.mxu0 0
        %846 = vmatmul.mubr.bf16.gmra.mrb[0].mxu0 %v724
        %v847 = vpop.f32.mrb[0].mxu0
        %v848 = vadd.f32 %v475, %v847
        %v849 = vpop.f32.mrb[0].mxu0
        %v850 = vadd.f32 %v475, %v849
        %v851 = vpop.f32.mrb[0].mxu0
        %v852 = vadd.f32 %v480, %v851
        %v853 = vpop.f32.mrb[0].mxu0
        %v854 = vadd.f32 %v480, %v853
        %855 = vmatprep.mubr.bf16.mxu0 0
        %856 = vmatmul.mubr.bf16.gmra.mrb[0].mxu0 %v727
        %v857 = vpop.f32.mrb[0].mxu0
        %v858 = vadd.f32 %v485, %v857
        %v859 = vpop.f32.mrb[0].mxu0
        %v860 = vadd.f32 %v485, %v859
        %v861 = vpop.f32.mrb[0].mxu0
        %v862 = vadd.f32 %v490, %v861
        %v863 = vpop.f32.mrb[0].mxu0
        %v864 = vadd.f32 %v490, %v863
        %865 = vmatprep.mubr.bf16.mxu0 0
        %866 = vmatmul.mubr.bf16.gmra.mrb[0].mxu0 %v730
        %v867 = vpop.f32.mrb[0].mxu0
        %v868 = vadd.f32 %v495, %v867
        %v869 = vpop.f32.mrb[0].mxu0
        %v870 = vadd.f32 %v495, %v869
        %v871 = vpop.f32.mrb[0].mxu0
        %v872 = vadd.f32 %v500, %v871
        %v873 = vpop.f32.mrb[0].mxu0
        %v874 = vadd.f32 %v500, %v873
        %875 = vmatprep.mubr.bf16.mxu0 0
        %876 = vmatmul.mubr.bf16.gmra.mrb[0].mxu0 %v733
        %v877 = vpop.f32.mrb[0].mxu0
        %v878 = vadd.f32 %v505, %v877
        %v879 = vpop.f32.mrb[0].mxu0
        %v880 = vadd.f32 %v505, %v879
        %v881 = vpop.f32.mrb[0].mxu0
        %v882 = vadd.f32 %v510, %v881
        %v883 = vpop.f32.mrb[0].mxu0
        %v884 = vadd.f32 %v510, %v883
        %885 = vmatprep.mubr.bf16.mxu0 0
        %886 = vmatmul.mubr.bf16.gmra.mrb[0].mxu0 %v736
        %v887 = vpop.f32.mrb[0].mxu0
        %v888 = vadd.f32 %v515, %v887
        %v889 = vpop.f32.mrb[0].mxu0
        %v890 = vadd.f32 %v515, %v889
        %v891 = vpop.f32.mrb[0].mxu0
        %v892 = vadd.f32 %v520, %v891
        %v893 = vpop.f32.mrb[0].mxu0
        %v894 = vadd.f32 %v520, %v893
        %895 = vmatprep.mubr.bf16.mxu0 0
        %896 = vmatmul.mubr.bf16.gmra.mrb[0].mxu0 %v739
        %v897 = vpop.f32.mrb[0].mxu0
        %v898 = vadd.f32 %v525, %v897
        %v899 = vpop.f32.mrb[0].mxu0
        %v900 = vadd.f32 %v525, %v899
        %v901 = vpop.f32.mrb[0].mxu0
        %v902 = vadd.f32 %v530, %v901
        %v903 = vpop.f32.mrb[0].mxu0
        %v904 = vadd.f32 %v530, %v903
        %905 = vmatprep.mubr.bf16.mxu0 0
        %906 = vmatmul.mubr.bf16.gmra.mrb[0].mxu0 %v742
        %v907 = vpop.f32.mrb[0].mxu0
        %v908 = vadd.f32 %v535, %v907
        %v909 = vpop.f32.mrb[0].mxu0
        %v910 = vadd.f32 %v535, %v909
        %v911 = vpop.f32.mrb[0].mxu0
        %v912 = vadd.f32 %v540, %v911
        %v913 = vpop.f32.mrb[0].mxu0
        %v914 = vadd.f32 %v540, %v913
        %915 = vmatprep.mubr.bf16.mxu0 0
        %916 = vmatmul.mubr.bf16.gmra.mrb[0].mxu0 %v745
        %v917 = vpop.f32.mrb[0].mxu0
        %v918 = vadd.f32 %v545, %v917
        %v919 = vpop.f32.mrb[0].mxu0
        %v920 = vadd.f32 %v545, %v919
        %v921 = vpop.f32.mrb[0].mxu0
        %v922 = vadd.f32 %v550, %v921
        %v923 = vpop.f32.mrb[0].mxu0
        %v924 = vadd.f32 %v550, %v923
        %925 = vmatprep.mubr.bf16.mxu0 0
        %926 = vmatmul.mubr.bf16.gmra.mrb[0].mxu0 %v748
        %v927 = vpop.f32.mrb[0].mxu0
        %v928 = vadd.f32 %v555, %v927
        %v929 = vpop.f32.mrb[0].mxu0
        %v930 = vadd.f32 %v555, %v929
        %v931 = vpop.f32.mrb[0].mxu0
        %v932 = vadd.f32 %v560, %v931
        %v933 = vpop.f32.mrb[0].mxu0
        %v934 = vadd.f32 %v560, %v933
        %935 = vmatprep.mubr.bf16.mxu0 0
        %936 = vmatmul.mubr.bf16.gmra.mrb[0].mxu0 %v751
        %v937 = vpop.f32.mrb[0].mxu0
        %v938 = vadd.f32 %v565, %v937
        %v939 = vpop.f32.mrb[0].mxu0
        %v940 = vadd.f32 %v565, %v939
        %v941 = vpop.f32.mrb[0].mxu0
        %v942 = vadd.f32 %v570, %v941
        %v943 = vpop.f32.mrb[0].mxu0
        %v944 = vadd.f32 %v570, %v943
        %945 = vmatprep.mubr.bf16.mxu0 0
        %946 = vmatmul.mubr.bf16.gmra.mrb[0].mxu0 %v754
        %v947 = vpop.f32.mrb[0].mxu0
        %v948 = vadd.f32 %v575, %v947
        %v949 = vpop.f32.mrb[0].mxu0
        %v950 = vadd.f32 %v575, %v949
        %v951 = vpop.f32.mrb[0].mxu0
        %v952 = vadd.f32 %v580, %v951
        %v953 = vpop.f32.mrb[0].mxu0
        %v954 = vadd.f32 %v580, %v953
        %955 = vdwg.mxu0
        %v956 = vmax.f32 %v798, 0.0
        %v957 = vmax.f32 %v800, 0.0
        %v958 = vmax.f32 %v802, 0.0
        %v959 = vmax.f32 %v804, 0.0
        %v960 = vmax.f32 %v808, 0.0
        %v961 = vmax.f32 %v810, 0.0
        %v962 = vmax.f32 %v812, 0.0
        %v963 = vmax.f32 %v814, 0.0
        %v964 = vmax.f32 %v818, 0.0
        %v965 = vmax.f32 %v820, 0.0
        %v966 = vmax.f32 %v822, 0.0
        %v967 = vmax.f32 %v824, 0.0
        %v968 = vmax.f32 %v828, 0.0
        %v969 = vmax.f32 %v830, 0.0
        %v970 = vmax.f32 %v832, 0.0
        %v971 = vmax.f32 %v834, 0.0
        %v972 = vmax.f32 %v838, 0.0
        %v973 = vmax.f32 %v840, 0.0
        %v974 = vmax.f32 %v842, 0.0
        %v975 = vmax.f32 %v844, 0.0
        %v976 = vmax.f32 %v848, 0.0
        %v977 = vmax.f32 %v850, 0.0
        %v978 = vmax.f32 %v852, 0.0
        %v979 = vmax.f32 %v854, 0.0
        %v980 = vmax.f32 %v858, 0.0
        %v981 = vmax.f32 %v860, 0.0
        %v982 = vmax.f32 %v862, 0.0
        %v983 = vmax.f32 %v864, 0.0
        %v984 = vmax.f32 %v868, 0.0
        %v985 = vmax.f32 %v870, 0.0
        %v986 = vmax.f32 %v872, 0.0
        %v987 = vmax.f32 %v874, 0.0
        %v988 = vmax.f32 %v878, 0.0
        %v989 = vmax.f32 %v880, 0.0
        %v990 = vmax.f32 %v882, 0.0
        %v991 = vmax.f32 %v884, 0.0
        %v992 = vmax.f32 %v888, 0.0
        %v993 = vmax.f32 %v890, 0.0
        %v994 = vmax.f32 %v892, 0.0
        %v995 = vmax.f32 %v894, 0.0
        %v996 = vmax.f32 %v898, 0.0
        %v997 = vmax.f32 %v900, 0.0
        %v998 = vmax.f32 %v902, 0.0
        %v999 = vmax.f32 %v904, 0.0
        %v1000 = vmax.f32 %v908, 0.0
        %v1001 = vmax.f32 %v910, 0.0
        %v1002 = vmax.f32 %v912, 0.0
        %v1003 = vmax.f32 %v914, 0.0
        %v1004 = vmax.f32 %v918, 0.0
        %v1005 = vmax.f32 %v920, 0.0
        %v1006 = vmax.f32 %v922, 0.0
        %v1007 = vmax.f32 %v924, 0.0
        %v1008 = vmax.f32 %v928, 0.0
        %v1009 = vmax.f32 %v930, 0.0
        %v1010 = vmax.f32 %v932, 0.0
        %v1011 = vmax.f32 %v934, 0.0
        %v1012 = vmax.f32 %v938, 0.0
        %v1013 = vmax.f32 %v940, 0.0
        %v1014 = vmax.f32 %v942, 0.0
        %v1015 = vmax.f32 %v944, 0.0
        %v1016 = vmax.f32 %v948, 0.0
        %v1017 = vmax.f32 %v950, 0.0
        %v1018 = vmax.f32 %v952, 0.0
        %v1019 = vmax.f32 %v954, 0.0
        %v1020 = vld [vmem:[%s5] sm:$0xff]
        %v1021 = vld [vmem:[%s5 + $0x8] sm:$0xff]
        %v1022 = vld [vmem:[%s5 + $0x10] sm:$0xff]
        %v1023 = vld [vmem:[%s5 + $0x18] sm:$0xff]
        %v1024 = vld [vmem:[%s5 + $0x20] sm:$0xff]
        %v1025 = vld [vmem:[%s5 + $0x28] sm:$0xff]
        %v1026 = vld [vmem:[%s5 + $0x30] sm:$0xff]
        %v1027 = vld [vmem:[%s5 + $0x38] sm:$0xff]
        %v1028 = vld [vmem:[%s5 + $0x40] sm:$0xff]
        %v1029 = vld [vmem:[%s5 + $0x48] sm:$0xff]
        %v1030 = vld [vmem:[%s5 + $0x50] sm:$0xff]
        %v1031 = vld [vmem:[%s5 + $0x58] sm:$0xff]
        %v1032 = vld [vmem:[%s5 + $0x60] sm:$0xff]
        %v1033 = vld [vmem:[%s5 + $0x68] sm:$0xff]
        %v1034 = vld [vmem:[%s5 + $0x70] sm:$0xff]
        %v1035 = vld [vmem:[%s5 + $0x78] sm:$0xff]
        %v1036 = vld [vmem:[%s5 + $0x80] sm:$0xff]
        %v1037 = vld [vmem:[%s5 + $0x88] sm:$0xff]
        %v1038 = vld [vmem:[%s5 + $0x90] sm:$0xff]
        %v1039 = vld [vmem:[%s5 + $0x98] sm:$0xff]
        %v1040 = vld [vmem:[%s5 + $0xa0] sm:$0xff]
        %v1041 = vld [vmem:[%s5 + $0xa8] sm:$0xff]
        %v1042 = vld [vmem:[%s5 + $0xb0] sm:$0xff]
        %v1043 = vld [vmem:[%s5 + $0xb8] sm:$0xff]
        %v1044 = vld [vmem:[%s5 + $0xc0] sm:$0xff]
        %v1045 = vld [vmem:[%s5 + $0xc8] sm:$0xff]
        %v1046 = vld [vmem:[%s5 + $0xd0] sm:$0xff]
        %v1047 = vld [vmem:[%s5 + $0xd8] sm:$0xff]
        %v1048 = vld [vmem:[%s5 + $0xe0] sm:$0xff]
        %v1049 = vld [vmem:[%s5 + $0xe8] sm:$0xff]
        %v1050 = vld [vmem:[%s5 + $0xf0] sm:$0xff]
        %v1051 = vld [vmem:[%s5 + $0xf8] sm:$0xff]
        %v1052 = vld [vmem:[%s7] sm:$0x3]
        %1054 = vset.pattern.permute.xlu0 0
        %1055 = vperm.xlu0 %1054, %v1020
        %v1056 = vpop.permute.xlu0 %1055
        %1059 = vset.pattern.permute.xlu0 0
        %1060 = vperm.xlu0 %1059, %v1021
        %v1061 = vpop.permute.xlu0 %1060
        %1064 = vset.pattern.permute.xlu0 0
        %1065 = vperm.xlu0 %1064, %v1022
        %v1066 = vpop.permute.xlu0 %1065
        %1069 = vset.pattern.permute.xlu0 0
        %1070 = vperm.xlu0 %1069, %v1023
        %v1071 = vpop.permute.xlu0 %1070
        %1074 = vset.pattern.permute.xlu0 0
        %1075 = vperm.xlu0 %1074, %v1024
        %v1076 = vpop.permute.xlu0 %1075
        %1079 = vset.pattern.permute.xlu0 0
        %1080 = vperm.xlu0 %1079, %v1025
        %v1081 = vpop.permute.xlu0 %1080
        %1084 = vset.pattern.permute.xlu0 0
        %1085 = vperm.xlu0 %1084, %v1026
        %v1086 = vpop.permute.xlu0 %1085
        %1089 = vset.pattern.permute.xlu0 0
        %1090 = vperm.xlu0 %1089, %v1027
        %v1091 = vpop.permute.xlu0 %1090
        %1094 = vset.pattern.permute.xlu0 0
        %1095 = vperm.xlu0 %1094, %v1028
        %v1096 = vpop.permute.xlu0 %1095
        %1099 = vset.pattern.permute.xlu0 0
        %1100 = vperm.xlu0 %1099, %v1029
        %v1101 = vpop.permute.xlu0 %1100
        %1104 = vset.pattern.permute.xlu0 0
        %1105 = vperm.xlu0 %1104, %v1030
        %v1106 = vpop.permute.xlu0 %1105
        %1109 = vset.pattern.permute.xlu0 0
        %1110 = vperm.xlu0 %1109, %v1031
        %v1111 = vpop.permute.xlu0 %1110
        %1114 = vset.pattern.permute.xlu0 0
        %1115 = vperm.xlu0 %1114, %v1032
        %v1116 = vpop.permute.xlu0 %1115
        %1119 = vset.pattern.permute.xlu0 0
        %1120 = vperm.xlu0 %1119, %v1033
        %v1121 = vpop.permute.xlu0 %1120
        %1124 = vset.pattern.permute.xlu0 0
        %1125 = vperm.xlu0 %1124, %v1034
        %v1126 = vpop.permute.xlu0 %1125
        %1129 = vset.pattern.permute.xlu0 0
        %1130 = vperm.xlu0 %1129, %v1035
        %v1131 = vpop.permute.xlu0 %1130
        %1134 = vset.pattern.permute.xlu0 0
        %1135 = vperm.xlu0 %1134, %v1036
        %v1136 = vpop.permute.xlu0 %1135
        %1139 = vset.pattern.permute.xlu0 0
        %1140 = vperm.xlu0 %1139, %v1037
        %v1141 = vpop.permute.xlu0 %1140
        %1144 = vset.pattern.permute.xlu0 0
        %1145 = vperm.xlu0 %1144, %v1038
        %v1146 = vpop.permute.xlu0 %1145
        %1149 = vset.pattern.permute.xlu0 0
        %1150 = vperm.xlu0 %1149, %v1039
        %v1151 = vpop.permute.xlu0 %1150
        %1154 = vset.pattern.permute.xlu0 0
        %1155 = vperm.xlu0 %1154, %v1040
        %v1156 = vpop.permute.xlu0 %1155
        %1159 = vset.pattern.permute.xlu0 0
        %1160 = vperm.xlu0 %1159, %v1041
        %v1161 = vpop.permute.xlu0 %1160
        %1164 = vset.pattern.permute.xlu0 0
        %1165 = vperm.xlu0 %1164, %v1042
        %v1166 = vpop.permute.xlu0 %1165
        %1169 = vset.pattern.permute.xlu0 0
        %1170 = vperm.xlu0 %1169, %v1043
        %v1171 = vpop.permute.xlu0 %1170
        %1174 = vset.pattern.permute.xlu0 0
        %1175 = vperm.xlu0 %1174, %v1044
        %v1176 = vpop.permute.xlu0 %1175
        %1179 = vset.pattern.permute.xlu0 0
        %1180 = vperm.xlu0 %1179, %v1045
        %v1181 = vpop.permute.xlu0 %1180
        %1184 = vset.pattern.permute.xlu0 0
        %1185 = vperm.xlu0 %1184, %v1046
        %v1186 = vpop.permute.xlu0 %1185
        %1189 = vset.pattern.permute.xlu0 0
        %1190 = vperm.xlu0 %1189, %v1047
        %v1191 = vpop.permute.xlu0 %1190
        %1194 = vset.pattern.permute.xlu0 0
        %1195 = vperm.xlu0 %1194, %v1048
        %v1196 = vpop.permute.xlu0 %1195
        %1199 = vset.pattern.permute.xlu0 0
        %1200 = vperm.xlu0 %1199, %v1049
        %v1201 = vpop.permute.xlu0 %1200
        %1204 = vset.pattern.permute.xlu0 0
        %1205 = vperm.xlu0 %1204, %v1050
        %v1206 = vpop.permute.xlu0 %1205
        %1209 = vset.pattern.permute.xlu0 0
        %1210 = vperm.xlu0 %1209, %v1051
        %v1211 = vpop.permute.xlu0 %1210
        %v1214 = vlaneseq
        %v1215 = vshrl.u32 %v1214, 7
        %v1216 = vsub.s32 0, %v1215
        %v1217 = vrot.slane %v1052, %v1216
        %v1218 = vlaneseq
        %v1219 = vshrl.u32 %v1218, 7
        %v1220 = vsub.s32 1, %v1219
        %v1221 = vrot.slane %v1052, %v1220
        %v1224 = vmul.f32 %v1056, %v1217
        %v1225 = vmul.f32 %v1056, %v1221
        %v1226 = vmul.f32 %v1061, %v1217
        %v1227 = vmul.f32 %v1061, %v1221
        %v1228 = vmul.f32 %v1066, %v1217
        %v1229 = vmul.f32 %v1066, %v1221
        %v1230 = vmul.f32 %v1071, %v1217
        %v1231 = vmul.f32 %v1071, %v1221
        %v1232 = vmul.f32 %v1076, %v1217
        %v1233 = vmul.f32 %v1076, %v1221
        %v1234 = vmul.f32 %v1081, %v1217
        %v1235 = vmul.f32 %v1081, %v1221
        %v1236 = vmul.f32 %v1086, %v1217
        %v1237 = vmul.f32 %v1086, %v1221
        %v1238 = vmul.f32 %v1091, %v1217
        %v1239 = vmul.f32 %v1091, %v1221
        %v1240 = vmul.f32 %v1096, %v1217
        %v1241 = vmul.f32 %v1096, %v1221
        %v1242 = vmul.f32 %v1101, %v1217
        %v1243 = vmul.f32 %v1101, %v1221
        %v1244 = vmul.f32 %v1106, %v1217
        %v1245 = vmul.f32 %v1106, %v1221
        %v1246 = vmul.f32 %v1111, %v1217
        %v1247 = vmul.f32 %v1111, %v1221
        %v1248 = vmul.f32 %v1116, %v1217
        %v1249 = vmul.f32 %v1116, %v1221
        %v1250 = vmul.f32 %v1121, %v1217
        %v1251 = vmul.f32 %v1121, %v1221
        %v1252 = vmul.f32 %v1126, %v1217
        %v1253 = vmul.f32 %v1126, %v1221
        %v1254 = vmul.f32 %v1131, %v1217
        %v1255 = vmul.f32 %v1131, %v1221
        %v1256 = vmul.f32 %v1136, %v1217
        %v1257 = vmul.f32 %v1136, %v1221
        %v1258 = vmul.f32 %v1141, %v1217
        %v1259 = vmul.f32 %v1141, %v1221
        %v1260 = vmul.f32 %v1146, %v1217
        %v1261 = vmul.f32 %v1146, %v1221
        %v1262 = vmul.f32 %v1151, %v1217
        %v1263 = vmul.f32 %v1151, %v1221
        %v1264 = vmul.f32 %v1156, %v1217
        %v1265 = vmul.f32 %v1156, %v1221
        %v1266 = vmul.f32 %v1161, %v1217
        %v1267 = vmul.f32 %v1161, %v1221
        %v1268 = vmul.f32 %v1166, %v1217
        %v1269 = vmul.f32 %v1166, %v1221
        %v1270 = vmul.f32 %v1171, %v1217
        %v1271 = vmul.f32 %v1171, %v1221
        %v1272 = vmul.f32 %v1176, %v1217
        %v1273 = vmul.f32 %v1176, %v1221
        %v1274 = vmul.f32 %v1181, %v1217
        %v1275 = vmul.f32 %v1181, %v1221
        %v1276 = vmul.f32 %v1186, %v1217
        %v1277 = vmul.f32 %v1186, %v1221
        %v1278 = vmul.f32 %v1191, %v1217
        %v1279 = vmul.f32 %v1191, %v1221
        %v1280 = vmul.f32 %v1196, %v1217
        %v1281 = vmul.f32 %v1196, %v1221
        %v1282 = vmul.f32 %v1201, %v1217
        %v1283 = vmul.f32 %v1201, %v1221
        %v1284 = vmul.f32 %v1206, %v1217
        %v1285 = vmul.f32 %v1206, %v1221
        %v1286 = vmul.f32 %v1211, %v1217
        %v1287 = vmul.f32 %v1211, %v1221
        %v1288 = vsub.f32 1.0, %v1224
        %v1289 = vsub.f32 1.0, %v1225
        %v1290 = vsub.f32 1.0, %v1226
        %v1291 = vsub.f32 1.0, %v1227
        %v1292 = vsub.f32 1.0, %v1228
        %v1293 = vsub.f32 1.0, %v1229
        %v1294 = vsub.f32 1.0, %v1230
        %v1295 = vsub.f32 1.0, %v1231
        %v1296 = vsub.f32 1.0, %v1232
        %v1297 = vsub.f32 1.0, %v1233
        %v1298 = vsub.f32 1.0, %v1234
        %v1299 = vsub.f32 1.0, %v1235
        %v1300 = vsub.f32 1.0, %v1236
        %v1301 = vsub.f32 1.0, %v1237
        %v1302 = vsub.f32 1.0, %v1238
        %v1303 = vsub.f32 1.0, %v1239
        %v1304 = vsub.f32 1.0, %v1240
        %v1305 = vsub.f32 1.0, %v1241
        %v1306 = vsub.f32 1.0, %v1242
        %v1307 = vsub.f32 1.0, %v1243
        %v1308 = vsub.f32 1.0, %v1244
        %v1309 = vsub.f32 1.0, %v1245
        %v1310 = vsub.f32 1.0, %v1246
        %v1311 = vsub.f32 1.0, %v1247
        %v1312 = vsub.f32 1.0, %v1248
        %v1313 = vsub.f32 1.0, %v1249
        %v1314 = vsub.f32 1.0, %v1250
        %v1315 = vsub.f32 1.0, %v1251
        %v1316 = vsub.f32 1.0, %v1252
        %v1317 = vsub.f32 1.0, %v1253
        %v1318 = vsub.f32 1.0, %v1254
        %v1319 = vsub.f32 1.0, %v1255
        %v1320 = vsub.f32 1.0, %v1256
        %v1321 = vsub.f32 1.0, %v1257
        %v1322 = vsub.f32 1.0, %v1258
        %v1323 = vsub.f32 1.0, %v1259
        %v1324 = vsub.f32 1.0, %v1260
        %v1325 = vsub.f32 1.0, %v1261
        %v1326 = vsub.f32 1.0, %v1262
        %v1327 = vsub.f32 1.0, %v1263
        %v1328 = vsub.f32 1.0, %v1264
        %v1329 = vsub.f32 1.0, %v1265
        %v1330 = vsub.f32 1.0, %v1266
        %v1331 = vsub.f32 1.0, %v1267
        %v1332 = vsub.f32 1.0, %v1268
        %v1333 = vsub.f32 1.0, %v1269
        %v1334 = vsub.f32 1.0, %v1270
        %v1335 = vsub.f32 1.0, %v1271
        %v1336 = vsub.f32 1.0, %v1272
        %v1337 = vsub.f32 1.0, %v1273
        %v1338 = vsub.f32 1.0, %v1274
        %v1339 = vsub.f32 1.0, %v1275
        %v1340 = vsub.f32 1.0, %v1276
        %v1341 = vsub.f32 1.0, %v1277
        %v1342 = vsub.f32 1.0, %v1278
        %v1343 = vsub.f32 1.0, %v1279
        %v1344 = vsub.f32 1.0, %v1280
        %v1345 = vsub.f32 1.0, %v1281
        %v1346 = vsub.f32 1.0, %v1282
        %v1347 = vsub.f32 1.0, %v1283
        %v1348 = vsub.f32 1.0, %v1284
        %v1349 = vsub.f32 1.0, %v1285
        %v1350 = vsub.f32 1.0, %v1286
        %v1351 = vsub.f32 1.0, %v1287
        %v1352 = vld [vmem:[%s6] sm:$0xff]
        %v1353 = vld [vmem:[%s6 + $0x8] sm:$0xff]
        %v1354 = vld [vmem:[%s6 + $0x10] sm:$0xff]
        %v1355 = vld [vmem:[%s6 + $0x18] sm:$0xff]
        %v1356 = vld [vmem:[%s6 + $0x20] sm:$0xff]
        %v1357 = vld [vmem:[%s6 + $0x28] sm:$0xff]
        %v1358 = vld [vmem:[%s6 + $0x30] sm:$0xff]
        %v1359 = vld [vmem:[%s6 + $0x38] sm:$0xff]
        %v1360 = vld [vmem:[%s6 + $0x40] sm:$0xff]
        %v1361 = vld [vmem:[%s6 + $0x48] sm:$0xff]
        %v1362 = vld [vmem:[%s6 + $0x50] sm:$0xff]
        %v1363 = vld [vmem:[%s6 + $0x58] sm:$0xff]
        %v1364 = vld [vmem:[%s6 + $0x60] sm:$0xff]
        %v1365 = vld [vmem:[%s6 + $0x68] sm:$0xff]
        %v1366 = vld [vmem:[%s6 + $0x70] sm:$0xff]
        %v1367 = vld [vmem:[%s6 + $0x78] sm:$0xff]
        %v1368 = vld [vmem:[%s6 + $0x80] sm:$0xff]
        %v1369 = vld [vmem:[%s6 + $0x88] sm:$0xff]
        %v1370 = vld [vmem:[%s6 + $0x90] sm:$0xff]
        %v1371 = vld [vmem:[%s6 + $0x98] sm:$0xff]
        %v1372 = vld [vmem:[%s6 + $0xa0] sm:$0xff]
        %v1373 = vld [vmem:[%s6 + $0xa8] sm:$0xff]
        %v1374 = vld [vmem:[%s6 + $0xb0] sm:$0xff]
        %v1375 = vld [vmem:[%s6 + $0xb8] sm:$0xff]
        %v1376 = vld [vmem:[%s6 + $0xc0] sm:$0xff]
        %v1377 = vld [vmem:[%s6 + $0xc8] sm:$0xff]
        %v1378 = vld [vmem:[%s6 + $0xd0] sm:$0xff]
        %v1379 = vld [vmem:[%s6 + $0xd8] sm:$0xff]
        %v1380 = vld [vmem:[%s6 + $0xe0] sm:$0xff]
        %v1381 = vld [vmem:[%s6 + $0xe8] sm:$0xff]
        %v1382 = vld [vmem:[%s6 + $0xf0] sm:$0xff]
        %v1383 = vld [vmem:[%s6 + $0xf8] sm:$0xff]
        %v1384 = vld [vmem:[%s8] sm:$0x3]
        %1386 = vset.pattern.permute.xlu0 0
        %1387 = vperm.xlu0 %1386, %v1352
        %v1388 = vpop.permute.xlu0 %1387
        %1391 = vset.pattern.permute.xlu0 0
        %1392 = vperm.xlu0 %1391, %v1353
        %v1393 = vpop.permute.xlu0 %1392
        %1396 = vset.pattern.permute.xlu0 0
        %1397 = vperm.xlu0 %1396, %v1354
        %v1398 = vpop.permute.xlu0 %1397
        %1401 = vset.pattern.permute.xlu0 0
        %1402 = vperm.xlu0 %1401, %v1355
        %v1403 = vpop.permute.xlu0 %1402
        %1406 = vset.pattern.permute.xlu0 0
        %1407 = vperm.xlu0 %1406, %v1356
        %v1408 = vpop.permute.xlu0 %1407
        %1411 = vset.pattern.permute.xlu0 0
        %1412 = vperm.xlu0 %1411, %v1357
        %v1413 = vpop.permute.xlu0 %1412
        %1416 = vset.pattern.permute.xlu0 0
        %1417 = vperm.xlu0 %1416, %v1358
        %v1418 = vpop.permute.xlu0 %1417
        %1421 = vset.pattern.permute.xlu0 0
        %1422 = vperm.xlu0 %1421, %v1359
        %v1423 = vpop.permute.xlu0 %1422
        %1426 = vset.pattern.permute.xlu0 0
        %1427 = vperm.xlu0 %1426, %v1360
        %v1428 = vpop.permute.xlu0 %1427
        %1431 = vset.pattern.permute.xlu0 0
        %1432 = vperm.xlu0 %1431, %v1361
        %v1433 = vpop.permute.xlu0 %1432
        %1436 = vset.pattern.permute.xlu0 0
        %1437 = vperm.xlu0 %1436, %v1362
        %v1438 = vpop.permute.xlu0 %1437
        %1441 = vset.pattern.permute.xlu0 0
        %1442 = vperm.xlu0 %1441, %v1363
        %v1443 = vpop.permute.xlu0 %1442
        %1446 = vset.pattern.permute.xlu0 0
        %1447 = vperm.xlu0 %1446, %v1364
        %v1448 = vpop.permute.xlu0 %1447
        %1451 = vset.pattern.permute.xlu0 0
        %1452 = vperm.xlu0 %1451, %v1365
        %v1453 = vpop.permute.xlu0 %1452
        %1456 = vset.pattern.permute.xlu0 0
        %1457 = vperm.xlu0 %1456, %v1366
        %v1458 = vpop.permute.xlu0 %1457
        %1461 = vset.pattern.permute.xlu0 0
        %1462 = vperm.xlu0 %1461, %v1367
        %v1463 = vpop.permute.xlu0 %1462
        %1466 = vset.pattern.permute.xlu0 0
        %1467 = vperm.xlu0 %1466, %v1368
        %v1468 = vpop.permute.xlu0 %1467
        %1471 = vset.pattern.permute.xlu0 0
        %1472 = vperm.xlu0 %1471, %v1369
        %v1473 = vpop.permute.xlu0 %1472
        %1476 = vset.pattern.permute.xlu0 0
        %1477 = vperm.xlu0 %1476, %v1370
        %v1478 = vpop.permute.xlu0 %1477
        %1481 = vset.pattern.permute.xlu0 0
        %1482 = vperm.xlu0 %1481, %v1371
        %v1483 = vpop.permute.xlu0 %1482
        %1486 = vset.pattern.permute.xlu0 0
        %1487 = vperm.xlu0 %1486, %v1372
        %v1488 = vpop.permute.xlu0 %1487
        %1491 = vset.pattern.permute.xlu0 0
        %1492 = vperm.xlu0 %1491, %v1373
        %v1493 = vpop.permute.xlu0 %1492
        %1496 = vset.pattern.permute.xlu0 0
        %1497 = vperm.xlu0 %1496, %v1374
        %v1498 = vpop.permute.xlu0 %1497
        %1501 = vset.pattern.permute.xlu0 0
        %1502 = vperm.xlu0 %1501, %v1375
        %v1503 = vpop.permute.xlu0 %1502
        %1506 = vset.pattern.permute.xlu0 0
        %1507 = vperm.xlu0 %1506, %v1376
        %v1508 = vpop.permute.xlu0 %1507
        %1511 = vset.pattern.permute.xlu0 0
        %1512 = vperm.xlu0 %1511, %v1377
        %v1513 = vpop.permute.xlu0 %1512
        %1516 = vset.pattern.permute.xlu0 0
        %1517 = vperm.xlu0 %1516, %v1378
        %v1518 = vpop.permute.xlu0 %1517
        %1521 = vset.pattern.permute.xlu0 0
        %1522 = vperm.xlu0 %1521, %v1379
        %v1523 = vpop.permute.xlu0 %1522
        %1526 = vset.pattern.permute.xlu0 0
        %1527 = vperm.xlu0 %1526, %v1380
        %v1528 = vpop.permute.xlu0 %1527
        %1531 = vset.pattern.permute.xlu0 0
        %1532 = vperm.xlu0 %1531, %v1381
        %v1533 = vpop.permute.xlu0 %1532
        %1536 = vset.pattern.permute.xlu0 0
        %1537 = vperm.xlu0 %1536, %v1382
        %v1538 = vpop.permute.xlu0 %1537
        %1541 = vset.pattern.permute.xlu0 0
        %1542 = vperm.xlu0 %1541, %v1383
        %v1543 = vpop.permute.xlu0 %1542
        %v1546 = vlaneseq
        %v1547 = vshrl.u32 %v1546, 7
        %v1548 = vsub.s32 0, %v1547
        %v1549 = vrot.slane %v1384, %v1548
        %v1550 = vlaneseq
        %v1551 = vshrl.u32 %v1550, 7
        %v1552 = vsub.s32 1, %v1551
        %v1553 = vrot.slane %v1384, %v1552
        %v1556 = vmul.f32 %v1388, %v1549
        %v1557 = vmul.f32 %v1388, %v1553
        %v1558 = vmul.f32 %v1393, %v1549
        %v1559 = vmul.f32 %v1393, %v1553
        %v1560 = vmul.f32 %v1398, %v1549
        %v1561 = vmul.f32 %v1398, %v1553
        %v1562 = vmul.f32 %v1403, %v1549
        %v1563 = vmul.f32 %v1403, %v1553
        %v1564 = vmul.f32 %v1408, %v1549
        %v1565 = vmul.f32 %v1408, %v1553
        %v1566 = vmul.f32 %v1413, %v1549
        %v1567 = vmul.f32 %v1413, %v1553
        %v1568 = vmul.f32 %v1418, %v1549
        %v1569 = vmul.f32 %v1418, %v1553
        %v1570 = vmul.f32 %v1423, %v1549
        %v1571 = vmul.f32 %v1423, %v1553
        %v1572 = vmul.f32 %v1428, %v1549
        %v1573 = vmul.f32 %v1428, %v1553
        %v1574 = vmul.f32 %v1433, %v1549
        %v1575 = vmul.f32 %v1433, %v1553
        %v1576 = vmul.f32 %v1438, %v1549
        %v1577 = vmul.f32 %v1438, %v1553
        %v1578 = vmul.f32 %v1443, %v1549
        %v1579 = vmul.f32 %v1443, %v1553
        %v1580 = vmul.f32 %v1448, %v1549
        %v1581 = vmul.f32 %v1448, %v1553
        %v1582 = vmul.f32 %v1453, %v1549
        %v1583 = vmul.f32 %v1453, %v1553
        %v1584 = vmul.f32 %v1458, %v1549
        %v1585 = vmul.f32 %v1458, %v1553
        %v1586 = vmul.f32 %v1463, %v1549
        %v1587 = vmul.f32 %v1463, %v1553
        %v1588 = vmul.f32 %v1468, %v1549
        %v1589 = vmul.f32 %v1468, %v1553
        %v1590 = vmul.f32 %v1473, %v1549
        %v1591 = vmul.f32 %v1473, %v1553
        %v1592 = vmul.f32 %v1478, %v1549
        %v1593 = vmul.f32 %v1478, %v1553
        %v1594 = vmul.f32 %v1483, %v1549
        %v1595 = vmul.f32 %v1483, %v1553
        %v1596 = vmul.f32 %v1488, %v1549
        %v1597 = vmul.f32 %v1488, %v1553
        %v1598 = vmul.f32 %v1493, %v1549
        %v1599 = vmul.f32 %v1493, %v1553
        %v1600 = vmul.f32 %v1498, %v1549
        %v1601 = vmul.f32 %v1498, %v1553
        %v1602 = vmul.f32 %v1503, %v1549
        %v1603 = vmul.f32 %v1503, %v1553
        %v1604 = vmul.f32 %v1508, %v1549
        %v1605 = vmul.f32 %v1508, %v1553
        %v1606 = vmul.f32 %v1513, %v1549
        %v1607 = vmul.f32 %v1513, %v1553
        %v1608 = vmul.f32 %v1518, %v1549
        %v1609 = vmul.f32 %v1518, %v1553
        %v1610 = vmul.f32 %v1523, %v1549
        %v1611 = vmul.f32 %v1523, %v1553
        %v1612 = vmul.f32 %v1528, %v1549
        %v1613 = vmul.f32 %v1528, %v1553
        %v1614 = vmul.f32 %v1533, %v1549
        %v1615 = vmul.f32 %v1533, %v1553
        %v1616 = vmul.f32 %v1538, %v1549
        %v1617 = vmul.f32 %v1538, %v1553
        %v1618 = vmul.f32 %v1543, %v1549
        %v1619 = vmul.f32 %v1543, %v1553
        %v1620 = vsub.f32 1.0, %v1556
        %v1621 = vsub.f32 1.0, %v1557
        %v1622 = vsub.f32 1.0, %v1558
        %v1623 = vsub.f32 1.0, %v1559
        %v1624 = vsub.f32 1.0, %v1560
        %v1625 = vsub.f32 1.0, %v1561
        %v1626 = vsub.f32 1.0, %v1562
        %v1627 = vsub.f32 1.0, %v1563
        %v1628 = vsub.f32 1.0, %v1564
        %v1629 = vsub.f32 1.0, %v1565
        %v1630 = vsub.f32 1.0, %v1566
        %v1631 = vsub.f32 1.0, %v1567
        %v1632 = vsub.f32 1.0, %v1568
        %v1633 = vsub.f32 1.0, %v1569
        %v1634 = vsub.f32 1.0, %v1570
        %v1635 = vsub.f32 1.0, %v1571
        %v1636 = vsub.f32 1.0, %v1572
        %v1637 = vsub.f32 1.0, %v1573
        %v1638 = vsub.f32 1.0, %v1574
        %v1639 = vsub.f32 1.0, %v1575
        %v1640 = vsub.f32 1.0, %v1576
        %v1641 = vsub.f32 1.0, %v1577
        %v1642 = vsub.f32 1.0, %v1578
        %v1643 = vsub.f32 1.0, %v1579
        %v1644 = vsub.f32 1.0, %v1580
        %v1645 = vsub.f32 1.0, %v1581
        %v1646 = vsub.f32 1.0, %v1582
        %v1647 = vsub.f32 1.0, %v1583
        %v1648 = vsub.f32 1.0, %v1584
        %v1649 = vsub.f32 1.0, %v1585
        %v1650 = vsub.f32 1.0, %v1586
        %v1651 = vsub.f32 1.0, %v1587
        %v1652 = vsub.f32 1.0, %v1588
        %v1653 = vsub.f32 1.0, %v1589
        %v1654 = vsub.f32 1.0, %v1590
        %v1655 = vsub.f32 1.0, %v1591
        %v1656 = vsub.f32 1.0, %v1592
        %v1657 = vsub.f32 1.0, %v1593
        %v1658 = vsub.f32 1.0, %v1594
        %v1659 = vsub.f32 1.0, %v1595
        %v1660 = vsub.f32 1.0, %v1596
        %v1661 = vsub.f32 1.0, %v1597
        %v1662 = vsub.f32 1.0, %v1598
        %v1663 = vsub.f32 1.0, %v1599
        %v1664 = vsub.f32 1.0, %v1600
        %v1665 = vsub.f32 1.0, %v1601
        %v1666 = vsub.f32 1.0, %v1602
        %v1667 = vsub.f32 1.0, %v1603
        %v1668 = vsub.f32 1.0, %v1604
        %v1669 = vsub.f32 1.0, %v1605
        %v1670 = vsub.f32 1.0, %v1606
        %v1671 = vsub.f32 1.0, %v1607
        %v1672 = vsub.f32 1.0, %v1608
        %v1673 = vsub.f32 1.0, %v1609
        %v1674 = vsub.f32 1.0, %v1610
        %v1675 = vsub.f32 1.0, %v1611
        %v1676 = vsub.f32 1.0, %v1612
        %v1677 = vsub.f32 1.0, %v1613
        %v1678 = vsub.f32 1.0, %v1614
        %v1679 = vsub.f32 1.0, %v1615
        %v1680 = vsub.f32 1.0, %v1616
        %v1681 = vsub.f32 1.0, %v1617
        %v1682 = vsub.f32 1.0, %v1618
        %v1683 = vsub.f32 1.0, %v1619
        %v1684 = vmul.f32 %v1288, %v1620
        %v1685 = vmul.f32 %v1289, %v1621
        %v1686 = vmul.f32 %v1290, %v1622
        %v1687 = vmul.f32 %v1291, %v1623
        %v1688 = vmul.f32 %v1292, %v1624
        %v1689 = vmul.f32 %v1293, %v1625
        %v1690 = vmul.f32 %v1294, %v1626
        %v1691 = vmul.f32 %v1295, %v1627
        %v1692 = vmul.f32 %v1296, %v1628
        %v1693 = vmul.f32 %v1297, %v1629
        %v1694 = vmul.f32 %v1298, %v1630
        %v1695 = vmul.f32 %v1299, %v1631
        %v1696 = vmul.f32 %v1300, %v1632
        %v1697 = vmul.f32 %v1301, %v1633
        %v1698 = vmul.f32 %v1302, %v1634
        %v1699 = vmul.f32 %v1303, %v1635
        %v1700 = vmul.f32 %v1304, %v1636
        %v1701 = vmul.f32 %v1305, %v1637
        %v1702 = vmul.f32 %v1306, %v1638
        %v1703 = vmul.f32 %v1307, %v1639
        %v1704 = vmul.f32 %v1308, %v1640
        %v1705 = vmul.f32 %v1309, %v1641
        %v1706 = vmul.f32 %v1310, %v1642
        %v1707 = vmul.f32 %v1311, %v1643
        %v1708 = vmul.f32 %v1312, %v1644
        %v1709 = vmul.f32 %v1313, %v1645
        %v1710 = vmul.f32 %v1314, %v1646
        %v1711 = vmul.f32 %v1315, %v1647
        %v1712 = vmul.f32 %v1316, %v1648
        %v1713 = vmul.f32 %v1317, %v1649
        %v1714 = vmul.f32 %v1318, %v1650
        %v1715 = vmul.f32 %v1319, %v1651
        %v1716 = vmul.f32 %v1320, %v1652
        %v1717 = vmul.f32 %v1321, %v1653
        %v1718 = vmul.f32 %v1322, %v1654
        %v1719 = vmul.f32 %v1323, %v1655
        %v1720 = vmul.f32 %v1324, %v1656
        %v1721 = vmul.f32 %v1325, %v1657
        %v1722 = vmul.f32 %v1326, %v1658
        %v1723 = vmul.f32 %v1327, %v1659
        %v1724 = vmul.f32 %v1328, %v1660
        %v1725 = vmul.f32 %v1329, %v1661
        %v1726 = vmul.f32 %v1330, %v1662
        %v1727 = vmul.f32 %v1331, %v1663
        %v1728 = vmul.f32 %v1332, %v1664
        %v1729 = vmul.f32 %v1333, %v1665
        %v1730 = vmul.f32 %v1334, %v1666
        %v1731 = vmul.f32 %v1335, %v1667
        %v1732 = vmul.f32 %v1336, %v1668
        %v1733 = vmul.f32 %v1337, %v1669
        %v1734 = vmul.f32 %v1338, %v1670
        %v1735 = vmul.f32 %v1339, %v1671
        %v1736 = vmul.f32 %v1340, %v1672
        %v1737 = vmul.f32 %v1341, %v1673
        %v1738 = vmul.f32 %v1342, %v1674
        %v1739 = vmul.f32 %v1343, %v1675
        %v1740 = vmul.f32 %v1344, %v1676
        %v1741 = vmul.f32 %v1345, %v1677
        %v1742 = vmul.f32 %v1346, %v1678
        %v1743 = vmul.f32 %v1347, %v1679
        %v1744 = vmul.f32 %v1348, %v1680
        %v1745 = vmul.f32 %v1349, %v1681
        %v1746 = vmul.f32 %v1350, %v1682
        %v1747 = vmul.f32 %v1351, %v1683
        %v1748 = vmul.f32 %v956, %v1684
        %v1749 = vmul.f32 %v957, %v1685
        %v1750 = vmul.f32 %v958, %v1686
        %v1751 = vmul.f32 %v959, %v1687
        %v1752 = vmul.f32 %v960, %v1688
        %v1753 = vmul.f32 %v961, %v1689
        %v1754 = vmul.f32 %v962, %v1690
        %v1755 = vmul.f32 %v963, %v1691
        %v1756 = vmul.f32 %v964, %v1692
        %v1757 = vmul.f32 %v965, %v1693
        %v1758 = vmul.f32 %v966, %v1694
        %v1759 = vmul.f32 %v967, %v1695
        %v1760 = vmul.f32 %v968, %v1696
        %v1761 = vmul.f32 %v969, %v1697
        %v1762 = vmul.f32 %v970, %v1698
        %v1763 = vmul.f32 %v971, %v1699
        %v1764 = vmul.f32 %v972, %v1700
        %v1765 = vmul.f32 %v973, %v1701
        %v1766 = vmul.f32 %v974, %v1702
        %v1767 = vmul.f32 %v975, %v1703
        %v1768 = vmul.f32 %v976, %v1704
        %v1769 = vmul.f32 %v977, %v1705
        %v1770 = vmul.f32 %v978, %v1706
        %v1771 = vmul.f32 %v979, %v1707
        %v1772 = vmul.f32 %v980, %v1708
        %v1773 = vmul.f32 %v981, %v1709
        %v1774 = vmul.f32 %v982, %v1710
        %v1775 = vmul.f32 %v983, %v1711
        %v1776 = vmul.f32 %v984, %v1712
        %v1777 = vmul.f32 %v985, %v1713
        %v1778 = vmul.f32 %v986, %v1714
        %v1779 = vmul.f32 %v987, %v1715
        %v1780 = vmul.f32 %v988, %v1716
        %v1781 = vmul.f32 %v989, %v1717
        %v1782 = vmul.f32 %v990, %v1718
        %v1783 = vmul.f32 %v991, %v1719
        %v1784 = vmul.f32 %v992, %v1720
        %v1785 = vmul.f32 %v993, %v1721
        %v1786 = vmul.f32 %v994, %v1722
        %v1787 = vmul.f32 %v995, %v1723
        %v1788 = vmul.f32 %v996, %v1724
        %v1789 = vmul.f32 %v997, %v1725
        %v1790 = vmul.f32 %v998, %v1726
        %v1791 = vmul.f32 %v999, %v1727
        %v1792 = vmul.f32 %v1000, %v1728
        %v1793 = vmul.f32 %v1001, %v1729
        %v1794 = vmul.f32 %v1002, %v1730
        %v1795 = vmul.f32 %v1003, %v1731
        %v1796 = vmul.f32 %v1004, %v1732
        %v1797 = vmul.f32 %v1005, %v1733
        %v1798 = vmul.f32 %v1006, %v1734
        %v1799 = vmul.f32 %v1007, %v1735
        %v1800 = vmul.f32 %v1008, %v1736
        %v1801 = vmul.f32 %v1009, %v1737
        %v1802 = vmul.f32 %v1010, %v1738
        %v1803 = vmul.f32 %v1011, %v1739
        %v1804 = vmul.f32 %v1012, %v1740
        %v1805 = vmul.f32 %v1013, %v1741
        %v1806 = vmul.f32 %v1014, %v1742
        %v1807 = vmul.f32 %v1015, %v1743
        %v1808 = vmul.f32 %v1016, %v1744
        %v1809 = vmul.f32 %v1017, %v1745
        %v1810 = vmul.f32 %v1018, %v1746
        %v1811 = vmul.f32 %v1019, %v1747
        %v1812 = vld [vmem:[#allocation2] sm:$0xff]
        %v1813 = vld [vmem:[#allocation2 + $0x8] sm:$0xff]
        %v1814 = vld [vmem:[#allocation2 + $0x10] sm:$0xff]
        %v1815 = vld [vmem:[#allocation2 + $0x18] sm:$0xff]
        %v1816 = vld [vmem:[#allocation2 + $0x20] sm:$0xff]
        %v1817 = vld [vmem:[#allocation2 + $0x28] sm:$0xff]
        %v1818 = vpack.c.bf16 %v1750, %v1748
        %v1819 = vpack.c.bf16 %v1751, %v1749
        %v1820 = vpack.c.bf16 %v1754, %v1752
        %v1821 = vpack.c.bf16 %v1755, %v1753
        %v1822 = vpack.c.bf16 %v1758, %v1756
        %v1823 = vpack.c.bf16 %v1759, %v1757
        %v1824 = vpack.c.bf16 %v1762, %v1760
        %v1825 = vpack.c.bf16 %v1763, %v1761
        %v1826 = vpack.c.bf16 %v1766, %v1764
        %v1827 = vpack.c.bf16 %v1767, %v1765
        %v1828 = vpack.c.bf16 %v1770, %v1768
        %v1829 = vpack.c.bf16 %v1771, %v1769
        %v1830 = vpack.c.bf16 %v1774, %v1772
        %v1831 = vpack.c.bf16 %v1775, %v1773
        %v1832 = vpack.c.bf16 %v1778, %v1776
        %v1833 = vpack.c.bf16 %v1779, %v1777
        %v1834 = vpack.c.bf16 %v1782, %v1780
        %v1835 = vpack.c.bf16 %v1783, %v1781
        %v1836 = vpack.c.bf16 %v1786, %v1784
        %v1837 = vpack.c.bf16 %v1787, %v1785
        %v1838 = vpack.c.bf16 %v1790, %v1788
        %v1839 = vpack.c.bf16 %v1791, %v1789
        %v1840 = vpack.c.bf16 %v1794, %v1792
        %v1841 = vpack.c.bf16 %v1795, %v1793
        %v1842 = vpack.c.bf16 %v1798, %v1796
        %v1843 = vpack.c.bf16 %v1799, %v1797
        %v1844 = vpack.c.bf16 %v1802, %v1800
        %v1845 = vpack.c.bf16 %v1803, %v1801
        %v1846 = vpack.c.bf16 %v1806, %v1804
        %v1847 = vpack.c.bf16 %v1807, %v1805
        %v1848 = vpack.c.bf16 %v1810, %v1808
        %v1849 = vpack.c.bf16 %v1811, %v1809
        %v1850 = vld [vmem:[%s4] sm:$0xff]
        %v1851 = vld [vmem:[%s4 + $0x8] sm:$0xff]
        %v1852 = vld [vmem:[%s4 + $0x10] sm:$0xff]
        %v1853 = vld [vmem:[%s4 + $0x18] sm:$0xff]
        %v1854 = vld [vmem:[%s4 + $0x20] sm:$0xff]
        %v1855 = vld [vmem:[%s4 + $0x28] sm:$0xff]
        %1857 = vset.pattern.permute.xlu0 0
        %1858 = vperm.xlu0 %1857, %v1850
        %v1859 = vpop.permute.xlu0 %1858
        %1862 = vset.pattern.permute.xlu0 0
        %1863 = vperm.xlu0 %1862, %v1851
        %v1864 = vpop.permute.xlu0 %1863
        %1867 = vset.pattern.permute.xlu0 0
        %1868 = vperm.xlu0 %1867, %v1852
        %v1869 = vpop.permute.xlu0 %1868
        %1872 = vset.pattern.permute.xlu0 0
        %1873 = vperm.xlu0 %1872, %v1853
        %v1874 = vpop.permute.xlu0 %1873
        %1877 = vset.pattern.permute.xlu0 0
        %1878 = vperm.xlu0 %1877, %v1854
        %v1879 = vpop.permute.xlu0 %1878
        %1882 = vset.pattern.permute.xlu0 0
        %1883 = vperm.xlu0 %1882, %v1855
        %v1884 = vpop.permute.xlu0 %1883
        %v1892 = vunpack.c.l.b16 %v1812
        %v1893 = vunpack.c.h.b16 %v1812
        %v1894 = vunpack.c.l.b16 %v1813
        %v1895 = vunpack.c.h.b16 %v1813
        %v1896 = vunpack.c.l.b16 %v1814
        %v1897 = vunpack.c.h.b16 %v1814
        %v1898 = vunpack.c.l.b16 %v1815
        %v1899 = vunpack.c.h.b16 %v1815
        %v1900 = vunpack.c.l.b16 %v1816
        %v1901 = vunpack.c.h.b16 %v1816
        %v1902 = vunpack.c.l.b16 %v1817
        %v1903 = vunpack.c.h.b16 %v1817
        %v1904 = vpack.c.b16 %v1894, %v1892
        %v1905 = vpack.c.b16 %v1895, %v1893
        %v1906 = vpack.c.b16 %v1898, %v1896
        %v1907 = vpack.c.b16 %v1899, %v1897
        %v1908 = vpack.c.b16 %v1902, %v1900
        %v1909 = vpack.c.b16 %v1903, %v1901
        %1916 = vmatprep.subr.bf16.mxu0 %v1819
        %1917 = vmatpush1.bf16.msra.mxu0 %v1818
        %1918 = vmatprep.subr.bf16.mxu0 %v1821
        %1919 = vmatpush1.bf16.msra.mxu0 %v1820
        %1920 = vmatprep.subr.bf16.mxu0 %v1823
        %1921 = vmatpush1.bf16.msra.mxu0 %v1822
        %1922 = vmatprep.subr.bf16.mxu0 %v1825
        %1923 = vmatpush1.bf16.msra.mxu0 %v1824
        %1924 = vmatprep.subr.bf16.mxu0 %v1827
        %1925 = vmatpush1.bf16.msra.mxu0 %v1826
        %1926 = vmatprep.subr.bf16.mxu0 %v1829
        %1927 = vmatpush1.bf16.msra.mxu0 %v1828
        %1928 = vmatprep.subr.bf16.mxu0 %v1831
        %1929 = vmatpush1.bf16.msra.mxu0 %v1830
        %1930 = vmatprep.subr.bf16.mxu0 %v1833
        %1931 = vmatpush1.bf16.msra.mxu0 %v1832
        %1932 = vmatprep.subr.bf16.mxu0 %v1835
        %1933 = vmatpush1.bf16.msra.mxu0 %v1834
        %1934 = vmatprep.subr.bf16.mxu0 %v1837
        %1935 = vmatpush1.bf16.msra.mxu0 %v1836
        %1936 = vmatprep.subr.bf16.mxu0 %v1839
        %1937 = vmatpush1.bf16.msra.mxu0 %v1838
        %1938 = vmatprep.subr.bf16.mxu0 %v1841
        %1939 = vmatpush1.bf16.msra.mxu0 %v1840
        %1940 = vmatprep.subr.bf16.mxu0 %v1843
        %1941 = vmatpush1.bf16.msra.mxu0 %v1842
        %1942 = vmatprep.subr.bf16.mxu0 %v1845
        %1943 = vmatpush1.bf16.msra.mxu0 %v1844
        %1944 = vmatprep.subr.bf16.mxu0 %v1847
        %1945 = vmatpush1.bf16.msra.mxu0 %v1846
        %1946 = vmatprep.subr.bf16.mxu0 %v1849
        %1947 = vmatpush1.bf16.msra.mxu0 %v1848
        %1948 = vmatprep.mubr.bf16.mxu0 %v1905
        %1949 = vmatmul.mubr.bf16.gmra.mrb[0].mxu0 %v1904
        %v1950 = vpop.f32.mrb[0].mxu0
        %v1951 = vadd.f32 %v1859, %v1950
        %v1952 = vpop.f32.mrb[0].mxu0
        %v1953 = vadd.f32 %v1859, %v1952
        %v1954 = vpop.f32.mrb[0].mxu0
        %v1955 = vadd.f32 %v1864, %v1954
        %v1956 = vpop.f32.mrb[0].mxu0
        %v1957 = vadd.f32 %v1864, %v1956
        %1958 = vmatprep.mubr.bf16.mxu0 %v1907
        %1959 = vmatmul.mubr.bf16.gmra.mrb[0].mxu0 %v1906
        %v1960 = vpop.f32.mrb[0].mxu0
        %v1961 = vadd.f32 %v1869, %v1960
        %v1962 = vpop.f32.mrb[0].mxu0
        %v1963 = vadd.f32 %v1869, %v1962
        %v1964 = vpop.f32.mrb[0].mxu0
        %v1965 = vadd.f32 %v1874, %v1964
        %v1966 = vpop.f32.mrb[0].mxu0
        %v1967 = vadd.f32 %v1874, %v1966
        %1968 = vmatprep.mubr.bf16.mxu0 %v1909
        %1969 = vmatmul.mubr.bf16.gmra.mrb[0].mxu0 %v1908
        %v1970 = vpop.f32.mrb[0].mxu0
        %v1971 = vadd.f32 %v1879, %v1970
        %v1972 = vpop.f32.mrb[0].mxu0
        %v1973 = vadd.f32 %v1879, %v1972
        %v1974 = vpop.f32.mrb[0].mxu0
        %v1975 = vadd.f32 %v1884, %v1974
        %v1976 = vpop.f32.mrb[0].mxu0
        %v1977 = vadd.f32 %v1884, %v1976
        %1978 = vdwg.mxu0
        %v1979 = vmul.f32 %v1951, 0.5
        %v1980 = vmul.f32 %v1953, 0.5
        %v1981 = vmul.f32 %v1955, 0.5
        %v1982 = vmul.f32 %v1957, 0.5
        %v1983 = vmul.f32 %v1961, 0.5
        %v1984 = vmul.f32 %v1963, 0.5
        %v1985 = vmul.f32 %v1965, 0.5
        %v1986 = vmul.f32 %v1967, 0.5
        %v1987 = vmul.f32 %v1971, 0.5
        %v1988 = vmul.f32 %v1973, 0.5
        %v1989 = vmul.f32 %v1975, 0.5
        %v1990 = vmul.f32 %v1977, 0.5
        %v1991 = vtanh.pop %v1979
        %v1992 = vtanh.pop %v1980
        %v1993 = vtanh.pop %v1981
        %v1994 = vtanh.pop %v1982
        %v1995 = vtanh.pop %v1983
        %v1996 = vtanh.pop %v1984
        %v1997 = vtanh.pop %v1985
        %v1998 = vtanh.pop %v1986
        %v1999 = vtanh.pop %v1987
        %v2000 = vtanh.pop %v1988
        %v2001 = vtanh.pop %v1989
        %v2002 = vtanh.pop %v1990
        %v2003 = vmul.f32 %v1991, 0.5
        %v2004 = vmul.f32 %v1992, 0.5
        %v2005 = vmul.f32 %v1993, 0.5
        %v2006 = vmul.f32 %v1994, 0.5
        %v2007 = vmul.f32 %v1995, 0.5
        %v2008 = vmul.f32 %v1996, 0.5
        %v2009 = vmul.f32 %v1997, 0.5
        %v2010 = vmul.f32 %v1998, 0.5
        %v2011 = vmul.f32 %v1999, 0.5
        %v2012 = vmul.f32 %v2000, 0.5
        %v2013 = vmul.f32 %v2001, 0.5
        %v2014 = vmul.f32 %v2002, 0.5
        %v2015 = vadd.f32 %v2003, 0.5
        %v2016 = vadd.f32 %v2004, 0.5
        %v2017 = vadd.f32 %v2005, 0.5
        %v2018 = vadd.f32 %v2006, 0.5
        %v2019 = vadd.f32 %v2007, 0.5
        %v2020 = vadd.f32 %v2008, 0.5
        %v2021 = vadd.f32 %v2009, 0.5
        %v2022 = vadd.f32 %v2010, 0.5
        %v2023 = vadd.f32 %v2011, 0.5
        %v2024 = vadd.f32 %v2012, 0.5
        %v2025 = vadd.f32 %v2013, 0.5
        %v2026 = vadd.f32 %v2014, 0.5
        %2027 = vst [vmem:[%s347] sm:$0xff] %v2015
        %2028 = vst [vmem:[%s347 + $0x8] sm:$0xff] %v2016
        %2029 = vst [vmem:[%s347 + $0x10] sm:$0xff] %v2017
        %2030 = vst [vmem:[%s347 + $0x18] sm:$0xff] %v2018
        %2031 = vst [vmem:[%s347 + $0x20] sm:$0xff] %v2019
        %2032 = vst [vmem:[%s347 + $0x28] sm:$0xff] %v2020
        %2033 = vst [vmem:[%s347 + $0x30] sm:$0xff] %v2021
        %2034 = vst [vmem:[%s347 + $0x38] sm:$0xff] %v2022
        %2035 = vst [vmem:[%s347 + $0x40] sm:$0xff] %v2023
        %2036 = vst [vmem:[%s347 + $0x48] sm:$0xff] %v2024
        %2037 = vst [vmem:[%s347 + $0x50] sm:$0xff] %v2025
        %2038 = vst [vmem:[%s347 + $0x58] sm:$0xff] %v2026
        %p2039 = scmp.lt.s32.totalorder %s21, 1
        %s2040 = scalar_select %p2039, %s21, 1
        %s2041 = smul.addr %s2040, 12
        %s2042 = smul.addr %s2041, 8
        %s2043 = scalar_lea.vmem %s9, %s2042
        // Predicated region
        $region61: #{color_decoder_forward.1} parent=55 // pred_check
          %p2044 = pneg %p233
        $region62: #{color_decoder_forward.1} parent=55 // pred_check_branch
          %2046 = sbr.rel (%p2044) target = $region64
        $region63: #{color_decoder_forward.1} parent=55 // pred_region
          _
        $region64: #{color_decoder_forward.1} parent=55 // pred_fallthru
          _
      $region56: #{color_decoder_forward.1} parent=5 // pred_fallthru
        _
      %p2047 = scmp.le.s32.totalorder 2, %s16
      // Predicated region
      $region65: #{color_decoder_forward.1} parent=5 // pred_check
        %p2048 = pneg %p2047
      $region66: #{color_decoder_forward.1} parent=5 // pred_check_branch
        %2050 = sbr.rel (%p2048) target = $region68
      $region67: #{color_decoder_forward.1} parent=5 // pred_region
        %s2051 = ssub.s32 %s16, 2
        // Predicated region
        $region69: #{color_decoder_forward.1} parent=67 // pred_check
          %p2052 = pneg %p239
        $region70: #{color_decoder_forward.1} parent=67 // pred_check_branch
          %2054 = sbr.rel (%p2052) target = $region72
        $region71: #{color_decoder_forward.1} parent=67 // pred_region
          %p2055 = scmp.lt.s32.totalorder %s22, 1
          %s2056 = scalar_select %p2055, %s22, 1
          %s2057 = smul.addr %s2056, 12
          %s2058 = smul.addr %s2057, 8
          %s2059 = scalar_lea.vmem %s9, %s2058
        $region72: #{color_decoder_forward.1} parent=67 // pred_fallthru
          _
      $region68: #{color_decoder_forward.1} parent=5 // pred_fallthru
        _
    $region6: #{color_decoder_forward.1} parent=1 // loop_footer
      %s20 = sadd.s32 1, %s16
    $region7: #{color_decoder_forward.1} parent=1 // loop_footer_branch
      %15 = sbr.rel target = $region3
    $region8: #{color_decoder_forward.1} parent=1 // loop_exit
      _
    %2060 = vsyncpa [#allocation3], 1
    %s2061 = scalar_lea.sflag [#allocation3], 1
    %2062 = vsyncpa %s2061, 1

</llo_original>
